<compile_context>
chip_gen: v7x
topology: tpu7x:2x2x1
jax: 0.10.0
libtpu: 0.0.40
codegen_flags: <defaults>
</compile_context>

<pallas_src>
import jax
import jax.numpy as jnp
from jax.experimental import pallas as pl
from jax.experimental.pallas import tpu as pltpu


def gru_decoder_kernel(x_ref, wih_ref, whh_ref, bih_ref, bhh_ref,
                       out_ref, gi_ref):
    """x_ref: (T*B, 2H); w*_ref: (2H, 3*2H); b*_ref: (1, 3*2H);
    out_ref: (T, B, 2H); gi_ref: VMEM scratch (T*B, 3*2H)."""
    T, B, H2 = out_ref.shape
    G = 3 * H2

    # --- Hoisted, recurrence-independent input projection: one batched MXU matmul.
    gi_ref[...] = jnp.dot(x_ref[...], wih_ref[...],
                          preferred_element_type=jnp.float32) + bih_ref[...]

    # --- Hoist the b_hh broadcast out of the unrolled loop.
    bhh = jnp.broadcast_to(bhh_ref[...], (B, G))

    # hidden_state = X[-1, ...]; carried in registers across the recurrence.
    h = x_ref[(T - 1) * B:T * B, :]

    # Sequential recurrence over T (small, static trip count -> unrolled Python loop,
    # equivalent to lax.fori_loop(unroll=True) after tracing).
    for t in range(T):
        gi = gi_ref[t * B:(t + 1) * B, :]                  # (B, 3*2H), aligned vld
        gh = jnp.dot(h, whh_ref[...],
                     preferred_element_type=jnp.float32) + bhh

        # torch.nn.GRUCell gate order: reset, update, new.
        r = jax.nn.sigmoid(gi[:, 0 * H2:1 * H2] + gh[:, 0 * H2:1 * H2])
        z = jax.nn.sigmoid(gi[:, 1 * H2:2 * H2] + gh[:, 1 * H2:2 * H2])
        n = jnp.tanh(gi[:, 2 * H2:3 * H2] + r * gh[:, 2 * H2:3 * H2])
        h = (1.0 - z) * n + z * h

        out_ref[t] = h                                     # output[t, ...] = GRUCell(...)


def hard_guided_attention_decoder(x, w_ih, w_hh, b_ih, b_hh):
    """x: (T, B, 2H) f32. Weights in torch.nn.GRUCell layout:
    w_ih, w_hh: (3*2H, 2H); b_ih, b_hh: (3*2H,). Returns (T, B, 2H) f32."""
    T, B, H2 = x.shape
    # One-off layout prep outside the hot kernel (free / fused by XLA):
    x_flat = x.reshape(T * B, H2)          # layout-preserving reshape
    w_ih_t = w_ih.T                        # (2H, 3*2H) -> plain row-major MXU matmul
    w_hh_t = w_hh.T
    b_ih_r = b_ih.reshape(1, 3 * H2)
    b_hh_r = b_hh.reshape(1, 3 * H2)

    vmem = pl.BlockSpec(memory_space=pltpu.MemorySpace.VMEM)
    return pl.pallas_call(
        gru_decoder_kernel,
        out_shape=jax.ShapeDtypeStruct((T, B, H2), jnp.float32),
        in_specs=[vmem, vmem, vmem, vmem, vmem],           # X, W_ih^T, W_hh^T, b_ih, b_hh
        out_specs=vmem,
        scratch_shapes=[pltpu.VMEM((T * B, 3 * H2), jnp.float32)],  # hoisted gi_all
    )(x_flat, w_ih_t, w_hh_t, b_ih_r, b_hh_r)


def reference_forward(x, w_ih, w_hh, b_ih, b_hh):
    """Pure-JAX reference of torch.nn.GRUCell unrolled exactly like the module."""
    T, B, H2 = x.shape
    h = x[-1]
    outs = []
    for t in range(T):
        gi = x[t] @ w_ih.T + b_ih
        gh = h @ w_hh.T + b_hh
        r = jax.nn.sigmoid(gi[:, :H2] + gh[:, :H2])
        z = jax.nn.sigmoid(gi[:, H2:2 * H2] + gh[:, H2:2 * H2])
        n = jnp.tanh(gi[:, 2 * H2:] + r * gh[:, 2 * H2:])
        h = (1.0 - z) * n + z * h
        outs.append(h)
    return jnp.stack(outs, axis=0)


if __name__ == "__main__":
    # Small, deterministic problem consistent with the module:
    # hidden_size=64 -> GRUCell feature dim 2*hidden = 128, sequence_length=5, batch=8.
    hidden_size = 64
    seq_len = 5
    batch = 8
    H2 = 2 * hidden_size          # GRUCell input size == hidden size == 2*hidden_size

    key = jax.random.PRNGKey(0)
    kx, kwi, kwh, kbi, kbh = jax.random.split(key, 5)

    # Input X: (T, B, 2H)
    x = jax.random.normal(kx, (seq_len, batch, H2), dtype=jnp.float32)

    # torch.nn.GRUCell parameters, torch layout: weight (3*2H, 2H), bias (3*2H,),
    # init uniform(-1/sqrt(hidden), 1/sqrt(hidden)), gate order r, z, n.
    k = 1.0 / jnp.sqrt(jnp.float32(H2))
    w_ih = jax.random.uniform(kwi, (3 * H2, H2), jnp.float32, -k, k)
    w_hh = jax.random.uniform(kwh, (3 * H2, H2), jnp.float32, -k, k)
    b_ih = jax.random.uniform(kbi, (3 * H2,), jnp.float32, -k, k)
    b_hh = jax.random.uniform(kbh, (3 * H2,), jnp.float32, -k, k)

    out = hard_guided_attention_decoder(x, w_ih, w_hh, b_ih, b_hh)
    out = jax.block_until_ready(out)

    ref = reference_forward(x, w_ih, w_hh, b_ih, b_hh)
    assert out.shape == x.shape, (out.shape, x.shape)
    assert jnp.allclose(out, ref, atol=1e-5, rtol=1e-5), "kernel != reference"

    print("KERNEL_OK")
</pallas_src>

<mosaic_0001>
module attributes {stable_mosaic.version = 11 : i64} {
  func.func @gru_decoder_kernel(%arg0: memref<40x128xf32, #tpu.memory_space<vmem>>, %arg1: memref<128x384xf32, #tpu.memory_space<vmem>>, %arg2: memref<128x384xf32, #tpu.memory_space<vmem>>, %arg3: memref<1x384xf32, #tpu.memory_space<vmem>>, %arg4: memref<1x384xf32, #tpu.memory_space<vmem>>, %arg5: memref<5x8x128xf32, #tpu.memory_space<vmem>>, %arg6: memref<40x384xf32, #tpu.memory_space<vmem>>) attributes {dimension_semantics = [], scalar_prefetch = 0 : i64, scratch_operands = 1 : i64, tpu.core_type = #tpu.core_type<tc>} {
    %c0 = arith.constant 0 : index
    %c0_0 = arith.constant 0 : index
    %0 = vector.load %arg0[%c0, %c0_0] : memref<40x128xf32, #tpu.memory_space<vmem>>, vector<40x128xf32>
    %c0_1 = arith.constant 0 : index
    %c0_2 = arith.constant 0 : index
    %1 = vector.load %arg1[%c0_1, %c0_2] : memref<128x384xf32, #tpu.memory_space<vmem>>, vector<128x384xf32>
    %cst = arith.constant dense<0.000000e+00> : vector<40x384xf32>
    %2 = tpu.matmul %0, %1, %cst {dimension_numbers = #tpu.dot_dimension_numbers<[1], [0], [0], [1], [0, 0, 1, 1], [], []>} : vector<40x128xf32>, vector<128x384xf32>, vector<40x384xf32> -> vector<40x384xf32>
    %c0_3 = arith.constant 0 : index
    %c0_4 = arith.constant 0 : index
    %3 = vector.load %arg3[%c0_3, %c0_4] : memref<1x384xf32, #tpu.memory_space<vmem>>, vector<1x384xf32>
    %4 = vector.broadcast %3 : vector<1x384xf32> to vector<40x384xf32>
    %5 = arith.addf %2, %4 : vector<40x384xf32>
    %c0_5 = arith.constant 0 : index
    %c0_6 = arith.constant 0 : index
    %6 = vector.load %arg6[%c0_5, %c0_6] : memref<40x384xf32, #tpu.memory_space<vmem>>, vector<40x384xf32>
    tpu.vector_store %arg6[%c0_5, %c0_6], %5 {strides = array<i32>} : memref<40x384xf32, #tpu.memory_space<vmem>>, vector<40x384xf32>,
    %c0_7 = arith.constant 0 : index
    %c0_8 = arith.constant 0 : index
    %7 = vector.load %arg4[%c0_7, %c0_8] : memref<1x384xf32, #tpu.memory_space<vmem>>, vector<1x384xf32>
    %8 = vector.shape_cast %7 : vector<1x384xf32> to vector<1x384xf32>
    %9 = vector.broadcast %8 : vector<1x384xf32> to vector<8x384xf32>
    %c32 = arith.constant 32 : index
    %c0_9 = arith.constant 0 : index
    %10 = vector.load %arg0[%c32, %c0_9] : memref<40x128xf32, #tpu.memory_space<vmem>>, vector<8x128xf32>
    %c0_10 = arith.constant 0 : index
    %c0_11 = arith.constant 0 : index
    %11 = vector.load %arg6[%c0_10, %c0_11] : memref<40x384xf32, #tpu.memory_space<vmem>>, vector<8x384xf32>
    %c0_12 = arith.constant 0 : index
    %c0_13 = arith.constant 0 : index
    %12 = vector.load %arg2[%c0_12, %c0_13] : memref<128x384xf32, #tpu.memory_space<vmem>>, vector<128x384xf32>
    %cst_14 = arith.constant dense<0.000000e+00> : vector<8x384xf32>
    %13 = tpu.matmul %10, %12, %cst_14 {dimension_numbers = #tpu.dot_dimension_numbers<[1], [0], [0], [1], [0, 0, 1, 1], [], []>} : vector<8x128xf32>, vector<128x384xf32>, vector<8x384xf32> -> vector<8x384xf32>
    %14 = arith.addf %13, %9 : vector<8x384xf32>
    %15 = vector.extract_strided_slice %11 {offsets = [0, 0], sizes = [8, 128], strides = [1, 1]} : vector<8x384xf32> to vector<8x128xf32>
    %16 = vector.extract_strided_slice %14 {offsets = [0, 0], sizes = [8, 128], strides = [1, 1]} : vector<8x384xf32> to vector<8x128xf32>
    %17 = arith.addf %15, %16 : vector<8x128xf32>
    %18 = arith.negf %17 : vector<8x128xf32>
    %19 = math.exp %18 : vector<8x128xf32>
    %cst_15 = arith.constant 1.000000e+00 : f32
    %20 = vector.broadcast %cst_15 : f32 to vector<8x128xf32>
    %21 = arith.addf %20, %19 : vector<8x128xf32>
    %22 = arith.divf %20, %21 : vector<8x128xf32>
    %23 = vector.extract_strided_slice %11 {offsets = [0, 128], sizes = [8, 128], strides = [1, 1]} : vector<8x384xf32> to vector<8x128xf32>
    %24 = vector.extract_strided_slice %14 {offsets = [0, 128], sizes = [8, 128], strides = [1, 1]} : vector<8x384xf32> to vector<8x128xf32>
    %25 = arith.addf %23, %24 : vector<8x128xf32>
    %26 = arith.negf %25 : vector<8x128xf32>
    %27 = math.exp %26 : vector<8x128xf32>
    %cst_16 = arith.constant 1.000000e+00 : f32
    %28 = vector.broadcast %cst_16 : f32 to vector<8x128xf32>
    %29 = arith.addf %28, %27 : vector<8x128xf32>
    %30 = arith.divf %28, %29 : vector<8x128xf32>
    %31 = vector.extract_strided_slice %11 {offsets = [0, 256], sizes = [8, 128], strides = [1, 1]} : vector<8x384xf32> to vector<8x128xf32>
    %32 = vector.extract_strided_slice %14 {offsets = [0, 256], sizes = [8, 128], strides = [1, 1]} : vector<8x384xf32> to vector<8x128xf32>
    %33 = arith.mulf %22, %32 : vector<8x128xf32>
    %34 = arith.addf %31, %33 : vector<8x128xf32>
    %35 = math.tanh %34 : vector<8x128xf32>
    %cst_17 = arith.constant 1.000000e+00 : f32
    %36 = vector.broadcast %cst_17 : f32 to vector<8x128xf32>
    %37 = arith.subf %36, %30 : vector<8x128xf32>
    %38 = arith.mulf %37, %35 : vector<8x128xf32>
    %39 = arith.mulf %30, %10 : vector<8x128xf32>
    %40 = arith.addf %38, %39 : vector<8x128xf32>
    %c0_18 = arith.constant 0 : index
    %c0_19 = arith.constant 0 : index
    %c0_20 = arith.constant 0 : index
    %41 = vector.load %arg5[%c0_18, %c0_19, %c0_20] : memref<5x8x128xf32, #tpu.memory_space<vmem>>, vector<1x8x128xf32>
    %42 = vector.shape_cast %41 : vector<1x8x128xf32> to vector<8x128xf32>
    %43 = vector.shape_cast %40 : vector<8x128xf32> to vector<1x8x128xf32>
    tpu.vector_store %arg5[%c0_18, %c0_19, %c0_20], %43 {strides = array<i32>} : memref<5x8x128xf32, #tpu.memory_space<vmem>>, vector<1x8x128xf32>,
    %c8 = arith.constant 8 : index
    %c0_21 = arith.constant 0 : index
    %44 = vector.load %arg6[%c8, %c0_21] : memref<40x384xf32, #tpu.memory_space<vmem>>, vector<8x384xf32>
    %c0_22 = arith.constant 0 : index
    %c0_23 = arith.constant 0 : index
    %45 = vector.load %arg2[%c0_22, %c0_23] : memref<128x384xf32, #tpu.memory_space<vmem>>, vector<128x384xf32>
    %cst_24 = arith.constant dense<0.000000e+00> : vector<8x384xf32>
    %46 = tpu.matmul %40, %45, %cst_24 {dimension_numbers = #tpu.dot_dimension_numbers<[1], [0], [0], [1], [0, 0, 1, 1], [], []>} : vector<8x128xf32>, vector<128x384xf32>, vector<8x384xf32> -> vector<8x384xf32>
    %47 = arith.addf %46, %9 : vector<8x384xf32>
    %48 = vector.extract_strided_slice %44 {offsets = [0, 0], sizes = [8, 128], strides = [1, 1]} : vector<8x384xf32> to vector<8x128xf32>
    %49 = vector.extract_strided_slice %47 {offsets = [0, 0], sizes = [8, 128], strides = [1, 1]} : vector<8x384xf32> to vector<8x128xf32>
    %50 = arith.addf %48, %49 : vector<8x128xf32>
    %51 = arith.negf %50 : vector<8x128xf32>
    %52 = math.exp %51 : vector<8x128xf32>
    %cst_25 = arith.constant 1.000000e+00 : f32
    %53 = vector.broadcast %cst_25 : f32 to vector<8x128xf32>
    %54 = arith.addf %53, %52 : vector<8x128xf32>
    %55 = arith.divf %53, %54 : vector<8x128xf32>
    %56 = vector.extract_strided_slice %44 {offsets = [0, 128], sizes = [8, 128], strides = [1, 1]} : vector<8x384xf32> to vector<8x128xf32>
    %57 = vector.extract_strided_slice %47 {offsets = [0, 128], sizes = [8, 128], strides = [1, 1]} : vector<8x384xf32> to vector<8x128xf32>
    %58 = arith.addf %56, %57 : vector<8x128xf32>
    %59 = arith.negf %58 : vector<8x128xf32>
    %60 = math.exp %59 : vector<8x128xf32>
    %cst_26 = arith.constant 1.000000e+00 : f32
    %61 = vector.broadcast %cst_26 : f32 to vector<8x128xf32>
    %62 = arith.addf %61, %60 : vector<8x128xf32>
    %63 = arith.divf %61, %62 : vector<8x128xf32>
    %64 = vector.extract_strided_slice %44 {offsets = [0, 256], sizes = [8, 128], strides = [1, 1]} : vector<8x384xf32> to vector<8x128xf32>
    %65 = vector.extract_strided_slice %47 {offsets = [0, 256], sizes = [8, 128], strides = [1, 1]} : vector<8x384xf32> to vector<8x128xf32>
    %66 = arith.mulf %55, %65 : vector<8x128xf32>
    %67 = arith.addf %64, %66 : vector<8x128xf32>
    %68 = math.tanh %67 : vector<8x128xf32>
    %cst_27 = arith.constant 1.000000e+00 : f32
    %69 = vector.broadcast %cst_27 : f32 to vector<8x128xf32>
    %70 = arith.subf %69, %63 : vector<8x128xf32>
    %71 = arith.mulf %70, %68 : vector<8x128xf32>
    %72 = arith.mulf %63, %40 : vector<8x128xf32>
    %73 = arith.addf %71, %72 : vector<8x128xf32>
    %c1 = arith.constant 1 : index
    %c0_28 = arith.constant 0 : index
    %c0_29 = arith.constant 0 : index
    %74 = vector.load %arg5[%c1, %c0_28, %c0_29] : memref<5x8x128xf32, #tpu.memory_space<vmem>>, vector<1x8x128xf32>
    %75 = vector.shape_cast %74 : vector<1x8x128xf32> to vector<8x128xf32>
    %76 = vector.shape_cast %73 : vector<8x128xf32> to vector<1x8x128xf32>
    tpu.vector_store %arg5[%c1, %c0_28, %c0_29], %76 {strides = array<i32>} : memref<5x8x128xf32, #tpu.memory_space<vmem>>, vector<1x8x128xf32>,
    %c16 = arith.constant 16 : index
    %c0_30 = arith.constant 0 : index
    %77 = vector.load %arg6[%c16, %c0_30] : memref<40x384xf32, #tpu.memory_space<vmem>>, vector<8x384xf32>
    %c0_31 = arith.constant 0 : index
    %c0_32 = arith.constant 0 : index
    %78 = vector.load %arg2[%c0_31, %c0_32] : memref<128x384xf32, #tpu.memory_space<vmem>>, vector<128x384xf32>
    %cst_33 = arith.constant dense<0.000000e+00> : vector<8x384xf32>
    %79 = tpu.matmul %73, %78, %cst_33 {dimension_numbers = #tpu.dot_dimension_numbers<[1], [0], [0], [1], [0, 0, 1, 1], [], []>} : vector<8x128xf32>, vector<128x384xf32>, vector<8x384xf32> -> vector<8x384xf32>
    %80 = arith.addf %79, %9 : vector<8x384xf32>
    %81 = vector.extract_strided_slice %77 {offsets = [0, 0], sizes = [8, 128], strides = [1, 1]} : vector<8x384xf32> to vector<8x128xf32>
    %82 = vector.extract_strided_slice %80 {offsets = [0, 0], sizes = [8, 128], strides = [1, 1]} : vector<8x384xf32> to vector<8x128xf32>
    %83 = arith.addf %81, %82 : vector<8x128xf32>
    %84 = arith.negf %83 : vector<8x128xf32>
    %85 = math.exp %84 : vector<8x128xf32>
    %cst_34 = arith.constant 1.000000e+00 : f32
    %86 = vector.broadcast %cst_34 : f32 to vector<8x128xf32>
    %87 = arith.addf %86, %85 : vector<8x128xf32>
    %88 = arith.divf %86, %87 : vector<8x128xf32>
    %89 = vector.extract_strided_slice %77 {offsets = [0, 128], sizes = [8, 128], strides = [1, 1]} : vector<8x384xf32> to vector<8x128xf32>
    %90 = vector.extract_strided_slice %80 {offsets = [0, 128], sizes = [8, 128], strides = [1, 1]} : vector<8x384xf32> to vector<8x128xf32>
    %91 = arith.addf %89, %90 : vector<8x128xf32>
    %92 = arith.negf %91 : vector<8x128xf32>
    %93 = math.exp %92 : vector<8x128xf32>
    %cst_35 = arith.constant 1.000000e+00 : f32
    %94 = vector.broadcast %cst_35 : f32 to vector<8x128xf32>
    %95 = arith.addf %94, %93 : vector<8x128xf32>
    %96 = arith.divf %94, %95 : vector<8x128xf32>
    %97 = vector.extract_strided_slice %77 {offsets = [0, 256], sizes = [8, 128], strides = [1, 1]} : vector<8x384xf32> to vector<8x128xf32>
    %98 = vector.extract_strided_slice %80 {offsets = [0, 256], sizes = [8, 128], strides = [1, 1]} : vector<8x384xf32> to vector<8x128xf32>
    %99 = arith.mulf %88, %98 : vector<8x128xf32>
    %100 = arith.addf %97, %99 : vector<8x128xf32>
    %101 = math.tanh %100 : vector<8x128xf32>
    %cst_36 = arith.constant 1.000000e+00 : f32
    %102 = vector.broadcast %cst_36 : f32 to vector<8x128xf32>
    %103 = arith.subf %102, %96 : vector<8x128xf32>
    %104 = arith.mulf %103, %101 : vector<8x128xf32>
    %105 = arith.mulf %96, %73 : vector<8x128xf32>
    %106 = arith.addf %104, %105 : vector<8x128xf32>
    %c2 = arith.constant 2 : index
    %c0_37 = arith.constant 0 : index
    %c0_38 = arith.constant 0 : index
    %107 = vector.load %arg5[%c2, %c0_37, %c0_38] : memref<5x8x128xf32, #tpu.memory_space<vmem>>, vector<1x8x128xf32>
    %108 = vector.shape_cast %107 : vector<1x8x128xf32> to vector<8x128xf32>
    %109 = vector.shape_cast %106 : vector<8x128xf32> to vector<1x8x128xf32>
    tpu.vector_store %arg5[%c2, %c0_37, %c0_38], %109 {strides = array<i32>} : memref<5x8x128xf32, #tpu.memory_space<vmem>>, vector<1x8x128xf32>,
    %c24 = arith.constant 24 : index
    %c0_39 = arith.constant 0 : index
    %110 = vector.load %arg6[%c24, %c0_39] : memref<40x384xf32, #tpu.memory_space<vmem>>, vector<8x384xf32>
    %c0_40 = arith.constant 0 : index
    %c0_41 = arith.constant 0 : index
    %111 = vector.load %arg2[%c0_40, %c0_41] : memref<128x384xf32, #tpu.memory_space<vmem>>, vector<128x384xf32>
    %cst_42 = arith.constant dense<0.000000e+00> : vector<8x384xf32>
    %112 = tpu.matmul %106, %111, %cst_42 {dimension_numbers = #tpu.dot_dimension_numbers<[1], [0], [0], [1], [0, 0, 1, 1], [], []>} : vector<8x128xf32>, vector<128x384xf32>, vector<8x384xf32> -> vector<8x384xf32>
    %113 = arith.addf %112, %9 : vector<8x384xf32>
    %114 = vector.extract_strided_slice %110 {offsets = [0, 0], sizes = [8, 128], strides = [1, 1]} : vector<8x384xf32> to vector<8x128xf32>
    %115 = vector.extract_strided_slice %113 {offsets = [0, 0], sizes = [8, 128], strides = [1, 1]} : vector<8x384xf32> to vector<8x128xf32>
    %116 = arith.addf %114, %115 : vector<8x128xf32>
    %117 = arith.negf %116 : vector<8x128xf32>
    %118 = math.exp %117 : vector<8x128xf32>
    %cst_43 = arith.constant 1.000000e+00 : f32
    %119 = vector.broadcast %cst_43 : f32 to vector<8x128xf32>
    %120 = arith.addf %119, %118 : vector<8x128xf32>
    %121 = arith.divf %119, %120 : vector<8x128xf32>
    %122 = vector.extract_strided_slice %110 {offsets = [0, 128], sizes = [8, 128], strides = [1, 1]} : vector<8x384xf32> to vector<8x128xf32>
    %123 = vector.extract_strided_slice %113 {offsets = [0, 128], sizes = [8, 128], strides = [1, 1]} : vector<8x384xf32> to vector<8x128xf32>
    %124 = arith.addf %122, %123 : vector<8x128xf32>
    %125 = arith.negf %124 : vector<8x128xf32>
    %126 = math.exp %125 : vector<8x128xf32>
    %cst_44 = arith.constant 1.000000e+00 : f32
    %127 = vector.broadcast %cst_44 : f32 to vector<8x128xf32>
    %128 = arith.addf %127, %126 : vector<8x128xf32>
    %129 = arith.divf %127, %128 : vector<8x128xf32>
    %130 = vector.extract_strided_slice %110 {offsets = [0, 256], sizes = [8, 128], strides = [1, 1]} : vector<8x384xf32> to vector<8x128xf32>
    %131 = vector.extract_strided_slice %113 {offsets = [0, 256], sizes = [8, 128], strides = [1, 1]} : vector<8x384xf32> to vector<8x128xf32>
    %132 = arith.mulf %121, %131 : vector<8x128xf32>
    %133 = arith.addf %130, %132 : vector<8x128xf32>
    %134 = math.tanh %133 : vector<8x128xf32>
    %cst_45 = arith.constant 1.000000e+00 : f32
    %135 = vector.broadcast %cst_45 : f32 to vector<8x128xf32>
    %136 = arith.subf %135, %129 : vector<8x128xf32>
    %137 = arith.mulf %136, %134 : vector<8x128xf32>
    %138 = arith.mulf %129, %106 : vector<8x128xf32>
    %139 = arith.addf %137, %138 : vector<8x128xf32>
    %c3 = arith.constant 3 : index
    %c0_46 = arith.constant 0 : index
    %c0_47 = arith.constant 0 : index
    %140 = vector.load %arg5[%c3, %c0_46, %c0_47] : memref<5x8x128xf32, #tpu.memory_space<vmem>>, vector<1x8x128xf32>
    %141 = vector.shape_cast %140 : vector<1x8x128xf32> to vector<8x128xf32>
    %142 = vector.shape_cast %139 : vector<8x128xf32> to vector<1x8x128xf32>
    tpu.vector_store %arg5[%c3, %c0_46, %c0_47], %142 {strides = array<i32>} : memref<5x8x128xf32, #tpu.memory_space<vmem>>, vector<1x8x128xf32>,
    %c32_48 = arith.constant 32 : index
    %c0_49 = arith.constant 0 : index
    %143 = vector.load %arg6[%c32_48, %c0_49] : memref<40x384xf32, #tpu.memory_space<vmem>>, vector<8x384xf32>
    %c0_50 = arith.constant 0 : index
    %c0_51 = arith.constant 0 : index
    %144 = vector.load %arg2[%c0_50, %c0_51] : memref<128x384xf32, #tpu.memory_space<vmem>>, vector<128x384xf32>
    %cst_52 = arith.constant dense<0.000000e+00> : vector<8x384xf32>
    %145 = tpu.matmul %139, %144, %cst_52 {dimension_numbers = #tpu.dot_dimension_numbers<[1], [0], [0], [1], [0, 0, 1, 1], [], []>} : vector<8x128xf32>, vector<128x384xf32>, vector<8x384xf32> -> vector<8x384xf32>
    %146 = arith.addf %145, %9 : vector<8x384xf32>
    %147 = vector.extract_strided_slice %143 {offsets = [0, 0], sizes = [8, 128], strides = [1, 1]} : vector<8x384xf32> to vector<8x128xf32>
    %148 = vector.extract_strided_slice %146 {offsets = [0, 0], sizes = [8, 128], strides = [1, 1]} : vector<8x384xf32> to vector<8x128xf32>
    %149 = arith.addf %147, %148 : vector<8x128xf32>
    %150 = arith.negf %149 : vector<8x128xf32>
    %151 = math.exp %150 : vector<8x128xf32>
    %cst_53 = arith.constant 1.000000e+00 : f32
    %152 = vector.broadcast %cst_53 : f32 to vector<8x128xf32>
    %153 = arith.addf %152, %151 : vector<8x128xf32>
    %154 = arith.divf %152, %153 : vector<8x128xf32>
    %155 = vector.extract_strided_slice %143 {offsets = [0, 128], sizes = [8, 128], strides = [1, 1]} : vector<8x384xf32> to vector<8x128xf32>
    %156 = vector.extract_strided_slice %146 {offsets = [0, 128], sizes = [8, 128], strides = [1, 1]} : vector<8x384xf32> to vector<8x128xf32>
    %157 = arith.addf %155, %156 : vector<8x128xf32>
    %158 = arith.negf %157 : vector<8x128xf32>
    %159 = math.exp %158 : vector<8x128xf32>
    %cst_54 = arith.constant 1.000000e+00 : f32
    %160 = vector.broadcast %cst_54 : f32 to vector<8x128xf32>
    %161 = arith.addf %160, %159 : vector<8x128xf32>
    %162 = arith.divf %160, %161 : vector<8x128xf32>
    %163 = vector.extract_strided_slice %143 {offsets = [0, 256], sizes = [8, 128], strides = [1, 1]} : vector<8x384xf32> to vector<8x128xf32>
    %164 = vector.extract_strided_slice %146 {offsets = [0, 256], sizes = [8, 128], strides = [1, 1]} : vector<8x384xf32> to vector<8x128xf32>
    %165 = arith.mulf %154, %164 : vector<8x128xf32>
    %166 = arith.addf %163, %165 : vector<8x128xf32>
    %167 = math.tanh %166 : vector<8x128xf32>
    %cst_55 = arith.constant 1.000000e+00 : f32
    %168 = vector.broadcast %cst_55 : f32 to vector<8x128xf32>
    %169 = arith.subf %168, %162 : vector<8x128xf32>
    %170 = arith.mulf %169, %167 : vector<8x128xf32>
    %171 = arith.mulf %162, %139 : vector<8x128xf32>
    %172 = arith.addf %170, %171 : vector<8x128xf32>
    %c4 = arith.constant 4 : index
    %c0_56 = arith.constant 0 : index
    %c0_57 = arith.constant 0 : index
    %173 = vector.load %arg5[%c4, %c0_56, %c0_57] : memref<5x8x128xf32, #tpu.memory_space<vmem>>, vector<1x8x128xf32>
    %174 = vector.shape_cast %173 : vector<1x8x128xf32> to vector<8x128xf32>
    %175 = vector.shape_cast %172 : vector<8x128xf32> to vector<1x8x128xf32>
    tpu.vector_store %arg5[%c4, %c0_56, %c0_57], %175 {strides = array<i32>} : memref<5x8x128xf32, #tpu.memory_space<vmem>>, vector<1x8x128xf32>,
    return
  }
}

</mosaic_0001>

<llo_original>
// kernel: tpu_custom_call.1
$region0: #{tpu_custom_call.1}
  #allocation0 [shape = 'u32[]', space=smem, size = 0x4, offset = 0x4, fixed_abs, tag = 'smem constant byte address 0x4 - core index']
  #allocation1 [shape = 'u32[144,128]{1,0:T(1,128)}', space=vmem, size = 0x12000, scoped, tag = 'internal scratch']
  #allocation2 [shape = 'f32[40,384]{1,0:T(8,128)}', space=vmem, size = 0xf000, scoped, tag = 'scratch operand']
  %s0 = inlined_call_operand.hbm [shape: f32[40,128], index: 0, kind: input, shape index: {}]
  %s1 = inlined_call_operand.hbm [shape: f32[128,384], index: 1, kind: input, shape index: {}]
  %s2 = inlined_call_operand.hbm [shape: f32[128,384], index: 2, kind: input, shape index: {}]
  %s3 = inlined_call_operand.vmem [shape: f32[1,384], index: 3, kind: input, shape index: {}]
  %s4 = inlined_call_operand.vmem [shape: f32[1,384], index: 4, kind: input, shape index: {}]
  %s5 = inlined_call_operand.hbm [shape: f32[5,8,128], index: 5, kind: output, shape index: {}]
  %s6 = sld [smem:[#allocation0]]
  $region42: #{tpu_custom_call.1} parent=0
    _
  %s8 = ssub.s32 1, %s6
  %s9 = scalar_select 0, %s8, %s6
  $region1: #{tpu_custom_call.1} parent=0
    #allocation3 [shape = 'u8[20480]{0}', space=vmem, size = 0x5000, scoped, tag = 'input window, operand 0, single buffered']
    #allocation4 [shape = 's32[1]{0}', space=sflag, size = 0x4, scoped, tag = 'scoped memory for tpu_custom_call.1']
    #allocation5 [shape = 's32[1]{0}', space=sflag, size = 0x4, scoped, tag = 'scoped memory for tpu_custom_call.1']
    #allocation6 [shape = 'u8[196608]{0}', space=vmem, size = 0x30000, scoped, tag = 'input window, operand 1, single buffered']
    #allocation7 [shape = 's32[1]{0}', space=sflag, size = 0x4, scoped, tag = 'scoped memory for tpu_custom_call.1']
    #allocation8 [shape = 'u8[196608]{0}', space=vmem, size = 0x30000, scoped, tag = 'input window, operand 2, single buffered']
    #allocation9 [shape = 'u8[20480]{0}', space=vmem, size = 0x5000, scoped, tag = 'output window, operand 0, single buffered']
    %10 = vsyncpa [#allocation4], 0
    %11 = vsyncpa [#allocation7], 0
    %12 = vsyncpa [#allocation5], 0
    // Predicated region
    $region2: #{tpu_custom_call.1} parent=1 // pred_check
      _
    $region3: #{tpu_custom_call.1} parent=1 // pred_check_branch
      %14 = sbr.rel (0) target = $region5
    $region4: #{tpu_custom_call.1} parent=1 // pred_region
      %s16 = ssub.s32 640, 640
      %17 = vsyncadd [#allocation4], %s16
      %s18 = sshll.u32 [#allocation3], 4
      %s19 = int_to_ptr.vmem [resolvable:$true] %s18
      %24 = dma.hbm_to_vmem [thread:$0]  %s0, 640, %s19, [#allocation4], 128, 128, 8
    $region5: #{tpu_custom_call.1} parent=1 // pred_fallthru
      _
    // Predicated region
    $region6: #{tpu_custom_call.1} parent=1 // pred_check
      _
    $region7: #{tpu_custom_call.1} parent=1 // pred_check_branch
      %26 = sbr.rel (0) target = $region9
    $region8: #{tpu_custom_call.1} parent=1 // pred_region
      %s28 = ssub.s32 6144, 6144
      %29 = vsyncadd [#allocation7], %s28
      %s30 = sshll.u32 [#allocation6], 4
      %s31 = int_to_ptr.vmem [resolvable:$true] %s30
      %36 = dma.hbm_to_vmem [thread:$0]  %s1, 6144, %s31, [#allocation7], 384, 384, 24
    $region9: #{tpu_custom_call.1} parent=1 // pred_fallthru
      _
    // Predicated region
    $region10: #{tpu_custom_call.1} parent=1 // pred_check
      _
    $region11: #{tpu_custom_call.1} parent=1 // pred_check_branch
      %38 = sbr.rel (0) target = $region13
    $region12: #{tpu_custom_call.1} parent=1 // pred_region
      %s40 = ssub.s32 6144, 6144
      %41 = vsyncadd [#allocation7], %s40
      %s42 = sshll.u32 [#allocation8], 4
      %s43 = int_to_ptr.vmem [resolvable:$true] %s42
      %48 = dma.hbm_to_vmem [thread:$0]  %s2, 6144, %s43, [#allocation7], 384, 384, 24
    $region13: #{tpu_custom_call.1} parent=1 // pred_fallthru
      _
    // Predicated region
    $region14: #{tpu_custom_call.1} parent=1 // pred_check
      _
    $region15: #{tpu_custom_call.1} parent=1 // pred_check_branch
      %50 = sbr.rel (0) target = $region17
    $region16: #{tpu_custom_call.1} parent=1 // pred_region
      _
    $region17: #{tpu_custom_call.1} parent=1 // pred_fallthru
      _
    // Predicated region
    $region18: #{tpu_custom_call.1} parent=1 // pred_check
      _
    $region19: #{tpu_custom_call.1} parent=1 // pred_check_branch
      %52 = sbr.rel (0) target = $region21
    $region20: #{tpu_custom_call.1} parent=1 // pred_region
      _
    $region21: #{tpu_custom_call.1} parent=1 // pred_fallthru
      _
    // Predicated region
    $region22: #{tpu_custom_call.1} parent=1 // pred_check
      _
    $region23: #{tpu_custom_call.1} parent=1 // pred_check_branch
      %54 = sbr.rel (0) target = $region25
    $region24: #{tpu_custom_call.1} parent=1 // pred_region
      %55 = dma.done [#allocation4], 640
    $region25: #{tpu_custom_call.1} parent=1 // pred_fallthru
      _
    // Predicated region
    $region26: #{tpu_custom_call.1} parent=1 // pred_check
      _
    $region27: #{tpu_custom_call.1} parent=1 // pred_check_branch
      %57 = sbr.rel (0) target = $region29
    $region28: #{tpu_custom_call.1} parent=1 // pred_region
      %58 = dma.done [#allocation7], 6144
    $region29: #{tpu_custom_call.1} parent=1 // pred_fallthru
      _
    // Predicated region
    $region30: #{tpu_custom_call.1} parent=1 // pred_check
      _
    $region31: #{tpu_custom_call.1} parent=1 // pred_check_branch
      %60 = sbr.rel (0) target = $region33
    $region32: #{tpu_custom_call.1} parent=1 // pred_region
      %61 = dma.done [#allocation7], 6144
    $region33: #{tpu_custom_call.1} parent=1 // pred_fallthru
      _
    %v62 = vld [vmem:[#allocation3] sm:$0xff]
    %v63 = vld [vmem:[#allocation3 + $0x8] sm:$0xff]
    %v64 = vld [vmem:[#allocation3 + $0x10] sm:$0xff]
    %v65 = vld [vmem:[#allocation3 + $0x18] sm:$0xff]
    %v66 = vld [vmem:[#allocation3 + $0x20] sm:$0xff]
    %v67 = vld [vmem:[#allocation6] sm:$0xff]
    %v68 = vld [vmem:[#allocation6 + $0x8] sm:$0xff]
    %v69 = vld [vmem:[#allocation6 + $0x10] sm:$0xff]
    %v70 = vld [vmem:[#allocation6 + $0x18] sm:$0xff]
    %v71 = vld [vmem:[#allocation6 + $0x20] sm:$0xff]
    %v72 = vld [vmem:[#allocation6 + $0x28] sm:$0xff]
    %v73 = vld [vmem:[#allocation6 + $0x30] sm:$0xff]
    %v74 = vld [vmem:[#allocation6 + $0x38] sm:$0xff]
    %v75 = vld [vmem:[#allocation6 + $0x40] sm:$0xff]
    %v76 = vld [vmem:[#allocation6 + $0x48] sm:$0xff]
    %v77 = vld [vmem:[#allocation6 + $0x50] sm:$0xff]
    %v78 = vld [vmem:[#allocation6 + $0x58] sm:$0xff]
    %v79 = vld [vmem:[#allocation6 + $0x60] sm:$0xff]
    %v80 = vld [vmem:[#allocation6 + $0x68] sm:$0xff]
    %v81 = vld [vmem:[#allocation6 + $0x70] sm:$0xff]
    %v82 = vld [vmem:[#allocation6 + $0x78] sm:$0xff]
    %v83 = vld [vmem:[#allocation6 + $0x80] sm:$0xff]
    %v84 = vld [vmem:[#allocation6 + $0x88] sm:$0xff]
    %v85 = vld [vmem:[#allocation6 + $0x90] sm:$0xff]
    %v86 = vld [vmem:[#allocation6 + $0x98] sm:$0xff]
    %v87 = vld [vmem:[#allocation6 + $0xa0] sm:$0xff]
    %v88 = vld [vmem:[#allocation6 + $0xa8] sm:$0xff]
    %v89 = vld [vmem:[#allocation6 + $0xb0] sm:$0xff]
    %v90 = vld [vmem:[#allocation6 + $0xb8] sm:$0xff]
    %v91 = vld [vmem:[#allocation6 + $0xc0] sm:$0xff]
    %v92 = vld [vmem:[#allocation6 + $0xc8] sm:$0xff]
    %v93 = vld [vmem:[#allocation6 + $0xd0] sm:$0xff]
    %v94 = vld [vmem:[#allocation6 + $0xd8] sm:$0xff]
    %v95 = vld [vmem:[#allocation6 + $0xe0] sm:$0xff]
    %v96 = vld [vmem:[#allocation6 + $0xe8] sm:$0xff]
    %v97 = vld [vmem:[#allocation6 + $0xf0] sm:$0xff]
    %v98 = vld [vmem:[#allocation6 + $0xf8] sm:$0xff]
    %v99 = vld [vmem:[#allocation6 + $0x100] sm:$0xff]
    %v100 = vld [vmem:[#allocation6 + $0x108] sm:$0xff]
    %v101 = vld [vmem:[#allocation6 + $0x110] sm:$0xff]
    %v102 = vld [vmem:[#allocation6 + $0x118] sm:$0xff]
    %v103 = vld [vmem:[#allocation6 + $0x120] sm:$0xff]
    %v104 = vld [vmem:[#allocation6 + $0x128] sm:$0xff]
    %v105 = vld [vmem:[#allocation6 + $0x130] sm:$0xff]
    %v106 = vld [vmem:[#allocation6 + $0x138] sm:$0xff]
    %v107 = vld [vmem:[#allocation6 + $0x140] sm:$0xff]
    %v108 = vld [vmem:[#allocation6 + $0x148] sm:$0xff]
    %v109 = vld [vmem:[#allocation6 + $0x150] sm:$0xff]
    %v110 = vld [vmem:[#allocation6 + $0x158] sm:$0xff]
    %v111 = vld [vmem:[#allocation6 + $0x160] sm:$0xff]
    %v112 = vld [vmem:[#allocation6 + $0x168] sm:$0xff]
    %v113 = vld [vmem:[#allocation6 + $0x170] sm:$0xff]
    %v114 = vld [vmem:[#allocation6 + $0x178] sm:$0xff]
    %v115 = vld [vmem:[%s3] sm:$0x7]
    %v117 = vlaneseq
    %v118 = vshrl.u32 %v117, 7
    %v119 = vsub.s32 0, %v118
    %v120 = vrot.slane %v115, %v119
    %v121 = vlaneseq
    %v122 = vshrl.u32 %v121, 7
    %v123 = vsub.s32 1, %v122
    %v124 = vrot.slane %v115, %v123
    %v125 = vlaneseq
    %v126 = vshrl.u32 %v125, 7
    %v127 = vsub.s32 2, %v126
    %v128 = vrot.slane %v115, %v127
    %132 = vmatprep.subr.mxu0 %v68
    %133 = vmatpush1.msra.mxu0 %v67
    %134 = vmatprep.subr.mxu0 %v71
    %135 = vmatpush1.msra.mxu0 %v70
    %136 = vmatprep.subr.mxu0 %v74
    %137 = vmatpush1.msra.mxu0 %v73
    %138 = vmatprep.subr.mxu0 %v77
    %139 = vmatpush1.msra.mxu0 %v76
    %140 = vmatprep.subr.mxu0 %v80
    %141 = vmatpush1.msra.mxu0 %v79
    %142 = vmatprep.subr.mxu0 %v83
    %143 = vmatpush1.msra.mxu0 %v82
    %144 = vmatprep.subr.mxu0 %v86
    %145 = vmatpush1.msra.mxu0 %v85
    %146 = vmatprep.subr.mxu0 %v89
    %147 = vmatpush1.msra.mxu0 %v88
    %148 = vmatprep.subr.mxu0 %v92
    %149 = vmatpush1.msra.mxu0 %v91
    %150 = vmatprep.subr.mxu0 %v95
    %151 = vmatpush1.msra.mxu0 %v94
    %152 = vmatprep.subr.mxu0 %v98
    %153 = vmatpush1.msra.mxu0 %v97
    %154 = vmatprep.subr.mxu0 %v101
    %155 = vmatpush1.msra.mxu0 %v100
    %156 = vmatprep.subr.mxu0 %v104
    %157 = vmatpush1.msra.mxu0 %v103
    %158 = vmatprep.subr.mxu0 %v107
    %159 = vmatpush1.msra.mxu0 %v106
    %160 = vmatprep.subr.mxu0 %v110
    %161 = vmatpush1.msra.mxu0 %v109
    %162 = vmatprep.subr.mxu0 %v113
    %163 = vmatpush1.msra.mxu0 %v112
    %164 = vmatprep.subr.mxu0 0.0
    %165 = vmatpush1.msra.mxu0 0.0
    %166 = vmatprep.subr.mxu0 0.0
    %167 = vmatpush1.msra.mxu0 0.0
    %168 = vmatprep.subr.mxu0 0.0
    %169 = vmatpush1.msra.mxu0 0.0
    %170 = vmatprep.subr.mxu0 0.0
    %171 = vmatpush1.msra.mxu0 0.0
    %172 = vmatprep.subr.mxu0 0.0
    %173 = vmatpush1.msra.mxu0 0.0
    %174 = vmatprep.subr.mxu0 0.0
    %175 = vmatpush1.msra.mxu0 0.0
    %176 = vmatprep.subr.mxu0 0.0
    %177 = vmatpush1.msra.mxu0 0.0
    %178 = vmatprep.subr.mxu0 0.0
    %179 = vmatpush1.msra.mxu0 0.0
    %180 = vmatprep.subr.mxu0 0.0
    %181 = vmatpush1.msra.mxu0 0.0
    %182 = vmatprep.subr.mxu0 0.0
    %183 = vmatpush1.msra.mxu0 0.0
    %184 = vmatprep.subr.mxu0 0.0
    %185 = vmatpush1.msra.mxu0 0.0
    %186 = vmatprep.subr.mxu0 0.0
    %187 = vmatpush1.msra.mxu0 0.0
    %188 = vmatprep.subr.mxu0 0.0
    %189 = vmatpush1.msra.mxu0 0.0
    %190 = vmatprep.subr.mxu0 0.0
    %191 = vmatpush1.msra.mxu0 0.0
    %192 = vmatprep.subr.mxu0 0.0
    %193 = vmatpush1.msra.mxu0 0.0
    %194 = vmatprep.subr.mxu0 0.0
    %195 = vmatpush1.msra.mxu0 0.0
    %196 = vmatprep.mubr.f32.mxu0 0.0
    %197 = vmatmul.mubr.f32.gmra.mrb[0].mxu0 %v62
    %v198 = vpop.f32.mrb[0].mxu0
    %v199 = vadd.f32 %v120, %v198
    %v200 = vpop.f32.mrb[0].mxu0
    %v201 = vadd.f32 %v124, %v200
    %202 = vmatprep.mubr.f32.mxu0 0.0
    %203 = vmatmul.mubr.f32.gmra.mrb[0].mxu0 %v63
    %v204 = vpop.f32.mrb[0].mxu0
    %v205 = vadd.f32 %v120, %v204
    %v206 = vpop.f32.mrb[0].mxu0
    %v207 = vadd.f32 %v124, %v206
    %208 = vmatprep.mubr.f32.mxu0 0.0
    %209 = vmatmul.mubr.f32.gmra.mrb[0].mxu0 %v64
    %v210 = vpop.f32.mrb[0].mxu0
    %v211 = vadd.f32 %v120, %v210
    %v212 = vpop.f32.mrb[0].mxu0
    %v213 = vadd.f32 %v124, %v212
    %214 = vmatprep.mubr.f32.mxu0 0.0
    %215 = vmatmul.mubr.f32.gmra.mrb[0].mxu0 %v65
    %v216 = vpop.f32.mrb[0].mxu0
    %v217 = vadd.f32 %v120, %v216
    %v218 = vpop.f32.mrb[0].mxu0
    %v219 = vadd.f32 %v124, %v218
    %220 = vmatprep.mubr.f32.mxu0 0.0
    %221 = vmatmul.mubr.f32.gmra.mrb[0].mxu0 %v66
    %v222 = vpop.f32.mrb[0].mxu0
    %v223 = vadd.f32 %v120, %v222
    %v224 = vpop.f32.mrb[0].mxu0
    %v225 = vadd.f32 %v124, %v224
    %226 = vdwg.mxu0
    %227 = vmatprep.subr.mxu0 0.0
    %228 = vmatpush1.msra.mxu0 %v69
    %229 = vmatprep.subr.mxu0 0.0
    %230 = vmatpush1.msra.mxu0 %v72
    %231 = vmatprep.subr.mxu0 0.0
    %232 = vmatpush1.msra.mxu0 %v75
    %233 = vmatprep.subr.mxu0 0.0
    %234 = vmatpush1.msra.mxu0 %v78
    %235 = vmatprep.subr.mxu0 0.0
    %236 = vmatpush1.msra.mxu0 %v81
    %237 = vmatprep.subr.mxu0 0.0
    %238 = vmatpush1.msra.mxu0 %v84
    %239 = vmatprep.subr.mxu0 0.0
    %240 = vmatpush1.msra.mxu0 %v87
    %241 = vmatprep.subr.mxu0 0.0
    %242 = vmatpush1.msra.mxu0 %v90
    %243 = vmatprep.subr.mxu0 0.0
    %244 = vmatpush1.msra.mxu0 %v93
    %245 = vmatprep.subr.mxu0 0.0
    %246 = vmatpush1.msra.mxu0 %v96
    %247 = vmatprep.subr.mxu0 0.0
    %248 = vmatpush1.msra.mxu0 %v99
    %249 = vmatprep.subr.mxu0 0.0
    %250 = vmatpush1.msra.mxu0 %v102
    %251 = vmatprep.subr.mxu0 0.0
    %252 = vmatpush1.msra.mxu0 %v105
    %253 = vmatprep.subr.mxu0 0.0
    %254 = vmatpush1.msra.mxu0 %v108
    %255 = vmatprep.subr.mxu0 0.0
    %256 = vmatpush1.msra.mxu0 %v111
    %257 = vmatprep.subr.mxu0 0.0
    %258 = vmatpush1.msra.mxu0 %v114
    %259 = vmatprep.subr.mxu0 0.0
    %260 = vmatpush1.msra.mxu0 0.0
    %261 = vmatprep.subr.mxu0 0.0
    %262 = vmatpush1.msra.mxu0 0.0
    %263 = vmatprep.subr.mxu0 0.0
    %264 = vmatpush1.msra.mxu0 0.0
    %265 = vmatprep.subr.mxu0 0.0
    %266 = vmatpush1.msra.mxu0 0.0
    %267 = vmatprep.subr.mxu0 0.0
    %268 = vmatpush1.msra.mxu0 0.0
    %269 = vmatprep.subr.mxu0 0.0
    %270 = vmatpush1.msra.mxu0 0.0
    %271 = vmatprep.subr.mxu0 0.0
    %272 = vmatpush1.msra.mxu0 0.0
    %273 = vmatprep.subr.mxu0 0.0
    %274 = vmatpush1.msra.mxu0 0.0
    %275 = vmatprep.subr.mxu0 0.0
    %276 = vmatpush1.msra.mxu0 0.0
    %277 = vmatprep.subr.mxu0 0.0
    %278 = vmatpush1.msra.mxu0 0.0
    %279 = vmatprep.subr.mxu0 0.0
    %280 = vmatpush1.msra.mxu0 0.0
    %281 = vmatprep.subr.mxu0 0.0
    %282 = vmatpush1.msra.mxu0 0.0
    %283 = vmatprep.subr.mxu0 0.0
    %284 = vmatpush1.msra.mxu0 0.0
    %285 = vmatprep.subr.mxu0 0.0
    %286 = vmatpush1.msra.mxu0 0.0
    %287 = vmatprep.subr.mxu0 0.0
    %288 = vmatpush1.msra.mxu0 0.0
    %289 = vmatprep.subr.mxu0 0.0
    %290 = vmatpush1.msra.mxu0 0.0
    %291 = vmatprep.mubr.f32.mxu0 0.0
    %292 = vmatmul.mubr.f32.gmra.mrb[0].mxu0 %v62
    %v293 = vpop.f32.mrb[0].mxu0
    %v294 = vadd.f32 %v128, %v293
    %v295 = vpop.f32.mrb[0].mxu0
    %296 = vmatprep.mubr.f32.mxu0 0.0
    %297 = vmatmul.mubr.f32.gmra.mrb[0].mxu0 %v63
    %v298 = vpop.f32.mrb[0].mxu0
    %v299 = vadd.f32 %v128, %v298
    %v300 = vpop.f32.mrb[0].mxu0
    %301 = vmatprep.mubr.f32.mxu0 0.0
    %302 = vmatmul.mubr.f32.gmra.mrb[0].mxu0 %v64
    %v303 = vpop.f32.mrb[0].mxu0
    %v304 = vadd.f32 %v128, %v303
    %v305 = vpop.f32.mrb[0].mxu0
    %306 = vmatprep.mubr.f32.mxu0 0.0
    %307 = vmatmul.mubr.f32.gmra.mrb[0].mxu0 %v65
    %v308 = vpop.f32.mrb[0].mxu0
    %v309 = vadd.f32 %v128, %v308
    %v310 = vpop.f32.mrb[0].mxu0
    %311 = vmatprep.mubr.f32.mxu0 0.0
    %312 = vmatmul.mubr.f32.gmra.mrb[0].mxu0 %v66
    %v313 = vpop.f32.mrb[0].mxu0
    %v314 = vadd.f32 %v128, %v313
    %v315 = vpop.f32.mrb[0].mxu0
    %316 = vdwg.mxu0
    %317 = vst [vmem:[#allocation2] sm:$0xff] %v199
    %318 = vst [vmem:[#allocation2 + $0x8] sm:$0xff] %v201
    %319 = vst [vmem:[#allocation2 + $0x10] sm:$0xff] %v294
    %320 = vst [vmem:[#allocation2 + $0x18] sm:$0xff] %v205
    %321 = vst [vmem:[#allocation2 + $0x20] sm:$0xff] %v207
    %322 = vst [vmem:[#allocation2 + $0x28] sm:$0xff] %v299
    %323 = vst [vmem:[#allocation2 + $0x30] sm:$0xff] %v211
    %324 = vst [vmem:[#allocation2 + $0x38] sm:$0xff] %v213
    %325 = vst [vmem:[#allocation2 + $0x40] sm:$0xff] %v304
    %326 = vst [vmem:[#allocation2 + $0x48] sm:$0xff] %v217
    %327 = vst [vmem:[#allocation2 + $0x50] sm:$0xff] %v219
    %328 = vst [vmem:[#allocation2 + $0x58] sm:$0xff] %v309
    %329 = vst [vmem:[#allocation2 + $0x60] sm:$0xff] %v223
    %330 = vst [vmem:[#allocation2 + $0x68] sm:$0xff] %v225
    %331 = vst [vmem:[#allocation2 + $0x70] sm:$0xff] %v314
    %v332 = vld [vmem:[%s4] sm:$0x7]
    %v334 = vlaneseq
    %v335 = vshrl.u32 %v334, 7
    %v336 = vsub.s32 0, %v335
    %v337 = vrot.slane %v332, %v336
    %v338 = vlaneseq
    %v339 = vshrl.u32 %v338, 7
    %v340 = vsub.s32 1, %v339
    %v341 = vrot.slane %v332, %v340
    %v342 = vlaneseq
    %v343 = vshrl.u32 %v342, 7
    %v344 = vsub.s32 2, %v343
    %v345 = vrot.slane %v332, %v344
    %v349 = vld [vmem:[#allocation3 + $0x20] sm:$0xff]
    %v350 = vld [vmem:[#allocation2] sm:$0xff]
    %v351 = vld [vmem:[#allocation2 + $0x8] sm:$0xff]
    %v352 = vld [vmem:[#allocation2 + $0x10] sm:$0xff]
    %v353 = vld [vmem:[#allocation8] sm:$0xff]
    %v354 = vld [vmem:[#allocation8 + $0x8] sm:$0xff]
    %v355 = vld [vmem:[#allocation8 + $0x10] sm:$0xff]
    %v356 = vld [vmem:[#allocation8 + $0x18] sm:$0xff]
    %v357 = vld [vmem:[#allocation8 + $0x20] sm:$0xff]
    %v358 = vld [vmem:[#allocation8 + $0x28] sm:$0xff]
    %v359 = vld [vmem:[#allocation8 + $0x30] sm:$0xff]
    %v360 = vld [vmem:[#allocation8 + $0x38] sm:$0xff]
    %v361 = vld [vmem:[#allocation8 + $0x40] sm:$0xff]
    %v362 = vld [vmem:[#allocation8 + $0x48] sm:$0xff]
    %v363 = vld [vmem:[#allocation8 + $0x50] sm:$0xff]
    %v364 = vld [vmem:[#allocation8 + $0x58] sm:$0xff]
    %v365 = vld [vmem:[#allocation8 + $0x60] sm:$0xff]
    %v366 = vld [vmem:[#allocation8 + $0x68] sm:$0xff]
    %v367 = vld [vmem:[#allocation8 + $0x70] sm:$0xff]
    %v368 = vld [vmem:[#allocation8 + $0x78] sm:$0xff]
    %v369 = vld [vmem:[#allocation8 + $0x80] sm:$0xff]
    %v370 = vld [vmem:[#allocation8 + $0x88] sm:$0xff]
    %v371 = vld [vmem:[#allocation8 + $0x90] sm:$0xff]
    %v372 = vld [vmem:[#allocation8 + $0x98] sm:$0xff]
    %v373 = vld [vmem:[#allocation8 + $0xa0] sm:$0xff]
    %v374 = vld [vmem:[#allocation8 + $0xa8] sm:$0xff]
    %v375 = vld [vmem:[#allocation8 + $0xb0] sm:$0xff]
    %v376 = vld [vmem:[#allocation8 + $0xb8] sm:$0xff]
    %v377 = vld [vmem:[#allocation8 + $0xc0] sm:$0xff]
    %v378 = vld [vmem:[#allocation8 + $0xc8] sm:$0xff]
    %v379 = vld [vmem:[#allocation8 + $0xd0] sm:$0xff]
    %v380 = vld [vmem:[#allocation8 + $0xd8] sm:$0xff]
    %v381 = vld [vmem:[#allocation8 + $0xe0] sm:$0xff]
    %v382 = vld [vmem:[#allocation8 + $0xe8] sm:$0xff]
    %v383 = vld [vmem:[#allocation8 + $0xf0] sm:$0xff]
    %v384 = vld [vmem:[#allocation8 + $0xf8] sm:$0xff]
    %v385 = vld [vmem:[#allocation8 + $0x100] sm:$0xff]
    %v386 = vld [vmem:[#allocation8 + $0x108] sm:$0xff]
    %v387 = vld [vmem:[#allocation8 + $0x110] sm:$0xff]
    %v388 = vld [vmem:[#allocation8 + $0x118] sm:$0xff]
    %v389 = vld [vmem:[#allocation8 + $0x120] sm:$0xff]
    %v390 = vld [vmem:[#allocation8 + $0x128] sm:$0xff]
    %v391 = vld [vmem:[#allocation8 + $0x130] sm:$0xff]
    %v392 = vld [vmem:[#allocation8 + $0x138] sm:$0xff]
    %v393 = vld [vmem:[#allocation8 + $0x140] sm:$0xff]
    %v394 = vld [vmem:[#allocation8 + $0x148] sm:$0xff]
    %v395 = vld [vmem:[#allocation8 + $0x150] sm:$0xff]
    %v396 = vld [vmem:[#allocation8 + $0x158] sm:$0xff]
    %v397 = vld [vmem:[#allocation8 + $0x160] sm:$0xff]
    %v398 = vld [vmem:[#allocation8 + $0x168] sm:$0xff]
    %v399 = vld [vmem:[#allocation8 + $0x170] sm:$0xff]
    %v400 = vld [vmem:[#allocation8 + $0x178] sm:$0xff]
    %401 = vmatprep.subr.mxu0 %v354
    %402 = vmatpush1.msra.mxu0 %v353
    %403 = vmatprep.subr.mxu0 %v357
    %404 = vmatpush1.msra.mxu0 %v356
    %405 = vmatprep.subr.mxu0 %v360
    %406 = vmatpush1.msra.mxu0 %v359
    %407 = vmatprep.subr.mxu0 %v363
    %408 = vmatpush1.msra.mxu0 %v362
    %409 = vmatprep.subr.mxu0 %v366
    %410 = vmatpush1.msra.mxu0 %v365
    %411 = vmatprep.subr.mxu0 %v369
    %412 = vmatpush1.msra.mxu0 %v368
    %413 = vmatprep.subr.mxu0 %v372
    %414 = vmatpush1.msra.mxu0 %v371
    %415 = vmatprep.subr.mxu0 %v375
    %416 = vmatpush1.msra.mxu0 %v374
    %417 = vmatprep.subr.mxu0 %v378
    %418 = vmatpush1.msra.mxu0 %v377
    %419 = vmatprep.subr.mxu0 %v381
    %420 = vmatpush1.msra.mxu0 %v380
    %421 = vmatprep.subr.mxu0 %v384
    %422 = vmatpush1.msra.mxu0 %v383
    %423 = vmatprep.subr.mxu0 %v387
    %424 = vmatpush1.msra.mxu0 %v386
    %425 = vmatprep.subr.mxu0 %v390
    %426 = vmatpush1.msra.mxu0 %v389
    %427 = vmatprep.subr.mxu0 %v393
    %428 = vmatpush1.msra.mxu0 %v392
    %429 = vmatprep.subr.mxu0 %v396
    %430 = vmatpush1.msra.mxu0 %v395
    %431 = vmatprep.subr.mxu0 %v399
    %432 = vmatpush1.msra.mxu0 %v398
    %433 = vmatprep.subr.mxu0 0.0
    %434 = vmatpush1.msra.mxu0 0.0
    %435 = vmatprep.subr.mxu0 0.0
    %436 = vmatpush1.msra.mxu0 0.0
    %437 = vmatprep.subr.mxu0 0.0
    %438 = vmatpush1.msra.mxu0 0.0
    %439 = vmatprep.subr.mxu0 0.0
    %440 = vmatpush1.msra.mxu0 0.0
    %441 = vmatprep.subr.mxu0 0.0
    %442 = vmatpush1.msra.mxu0 0.0
    %443 = vmatprep.subr.mxu0 0.0
    %444 = vmatpush1.msra.mxu0 0.0
    %445 = vmatprep.subr.mxu0 0.0
    %446 = vmatpush1.msra.mxu0 0.0
    %447 = vmatprep.subr.mxu0 0.0
    %448 = vmatpush1.msra.mxu0 0.0
    %449 = vmatprep.subr.mxu0 0.0
    %450 = vmatpush1.msra.mxu0 0.0
    %451 = vmatprep.subr.mxu0 0.0
    %452 = vmatpush1.msra.mxu0 0.0
    %453 = vmatprep.subr.mxu0 0.0
    %454 = vmatpush1.msra.mxu0 0.0
    %455 = vmatprep.subr.mxu0 0.0
    %456 = vmatpush1.msra.mxu0 0.0
    %457 = vmatprep.subr.mxu0 0.0
    %458 = vmatpush1.msra.mxu0 0.0
    %459 = vmatprep.subr.mxu0 0.0
    %460 = vmatpush1.msra.mxu0 0.0
    %461 = vmatprep.subr.mxu0 0.0
    %462 = vmatpush1.msra.mxu0 0.0
    %463 = vmatprep.subr.mxu0 0.0
    %464 = vmatpush1.msra.mxu0 0.0
    %465 = vmatprep.mubr.f32.mxu0 0.0
    %466 = vmatmul.mubr.f32.gmra.mrb[0].mxu0 %v349
    %v467 = vpop.f32.mrb[0].mxu0
    %v468 = vadd.f32 %v337, %v467
    %v469 = vpop.f32.mrb[0].mxu0
    %v470 = vadd.f32 %v341, %v469
    %471 = vdwg.mxu0
    %472 = vmatprep.subr.mxu0 0.0
    %473 = vmatpush1.msra.mxu0 %v355
    %474 = vmatprep.subr.mxu0 0.0
    %475 = vmatpush1.msra.mxu0 %v358
    %476 = vmatprep.subr.mxu0 0.0
    %477 = vmatpush1.msra.mxu0 %v361
    %478 = vmatprep.subr.mxu0 0.0
    %479 = vmatpush1.msra.mxu0 %v364
    %480 = vmatprep.subr.mxu0 0.0
    %481 = vmatpush1.msra.mxu0 %v367
    %482 = vmatprep.subr.mxu0 0.0
    %483 = vmatpush1.msra.mxu0 %v370
    %484 = vmatprep.subr.mxu0 0.0
    %485 = vmatpush1.msra.mxu0 %v373
    %486 = vmatprep.subr.mxu0 0.0
    %487 = vmatpush1.msra.mxu0 %v376
    %488 = vmatprep.subr.mxu0 0.0
    %489 = vmatpush1.msra.mxu0 %v379
    %490 = vmatprep.subr.mxu0 0.0
    %491 = vmatpush1.msra.mxu0 %v382
    %492 = vmatprep.subr.mxu0 0.0
    %493 = vmatpush1.msra.mxu0 %v385
    %494 = vmatprep.subr.mxu0 0.0
    %495 = vmatpush1.msra.mxu0 %v388
    %496 = vmatprep.subr.mxu0 0.0
    %497 = vmatpush1.msra.mxu0 %v391
    %498 = vmatprep.subr.mxu0 0.0
    %499 = vmatpush1.msra.mxu0 %v394
    %500 = vmatprep.subr.mxu0 0.0
    %501 = vmatpush1.msra.mxu0 %v397
    %502 = vmatprep.subr.mxu0 0.0
    %503 = vmatpush1.msra.mxu0 %v400
    %504 = vmatprep.subr.mxu0 0.0
    %505 = vmatpush1.msra.mxu0 0.0
    %506 = vmatprep.subr.mxu0 0.0
    %507 = vmatpush1.msra.mxu0 0.0
    %508 = vmatprep.subr.mxu0 0.0
    %509 = vmatpush1.msra.mxu0 0.0
    %510 = vmatprep.subr.mxu0 0.0
    %511 = vmatpush1.msra.mxu0 0.0
    %512 = vmatprep.subr.mxu0 0.0
    %513 = vmatpush1.msra.mxu0 0.0
    %514 = vmatprep.subr.mxu0 0.0
    %515 = vmatpush1.msra.mxu0 0.0
    %516 = vmatprep.subr.mxu0 0.0
    %517 = vmatpush1.msra.mxu0 0.0
    %518 = vmatprep.subr.mxu0 0.0
    %519 = vmatpush1.msra.mxu0 0.0
    %520 = vmatprep.subr.mxu0 0.0
    %521 = vmatpush1.msra.mxu0 0.0
    %522 = vmatprep.subr.mxu0 0.0
    %523 = vmatpush1.msra.mxu0 0.0
    %524 = vmatprep.subr.mxu0 0.0
    %525 = vmatpush1.msra.mxu0 0.0
    %526 = vmatprep.subr.mxu0 0.0
    %527 = vmatpush1.msra.mxu0 0.0
    %528 = vmatprep.subr.mxu0 0.0
    %529 = vmatpush1.msra.mxu0 0.0
    %530 = vmatprep.subr.mxu0 0.0
    %531 = vmatpush1.msra.mxu0 0.0
    %532 = vmatprep.subr.mxu0 0.0
    %533 = vmatpush1.msra.mxu0 0.0
    %534 = vmatprep.subr.mxu0 0.0
    %535 = vmatpush1.msra.mxu0 0.0
    %536 = vmatprep.mubr.f32.mxu0 0.0
    %537 = vmatmul.mubr.f32.gmra.mrb[0].mxu0 %v349
    %v538 = vpop.f32.mrb[0].mxu0
    %v539 = vadd.f32 %v345, %v538
    %v540 = vpop.f32.mrb[0].mxu0
    %541 = vdwg.mxu0
    %v542 = vadd.f32 %v350, %v468
    %v543 = vxor.u32 %v542, 2147483648
    %v544 = vmul.f32 %v543, 1.442695
    %v545 = vpow.pop %v544
    %v546 = vadd.f32 %v545, 1.0
    %v547 = vrcp.pop %v546
    %v548 = vmul.f32 1.0, %v547
    %v549 = vadd.f32 %v351, %v470
    %v550 = vxor.u32 %v549, 2147483648
    %v551 = vmul.f32 %v550, 1.442695
    %v552 = vpow.pop %v551
    %v553 = vadd.f32 %v552, 1.0
    %v554 = vrcp.pop %v553
    %v555 = vmul.f32 1.0, %v554
    %v556 = vmul.f32 %v548, %v539
    %v557 = vadd.f32 %v352, %v556
    %v558 = vtanh.pop %v557
    %v559 = vsub.f32 1.0, %v555
    %v560 = vmul.f32 %v559, %v558
    %v561 = vmul.f32 %v555, %v349
    %v562 = vadd.f32 %v560, %v561
    %563 = vst [vmem:[#allocation9] sm:$0xff] %v562
    %v564 = vld [vmem:[#allocation2 + $0x18] sm:$0xff]
    %v565 = vld [vmem:[#allocation2 + $0x20] sm:$0xff]
    %v566 = vld [vmem:[#allocation2 + $0x28] sm:$0xff]
    %v567 = vld [vmem:[#allocation8] sm:$0xff]
    %v568 = vld [vmem:[#allocation8 + $0x8] sm:$0xff]
    %v569 = vld [vmem:[#allocation8 + $0x10] sm:$0xff]
    %v570 = vld [vmem:[#allocation8 + $0x18] sm:$0xff]
    %v571 = vld [vmem:[#allocation8 + $0x20] sm:$0xff]
    %v572 = vld [vmem:[#allocation8 + $0x28] sm:$0xff]
    %v573 = vld [vmem:[#allocation8 + $0x30] sm:$0xff]
    %v574 = vld [vmem:[#allocation8 + $0x38] sm:$0xff]
    %v575 = vld [vmem:[#allocation8 + $0x40] sm:$0xff]
    %v576 = vld [vmem:[#allocation8 + $0x48] sm:$0xff]
    %v577 = vld [vmem:[#allocation8 + $0x50] sm:$0xff]
    %v578 = vld [vmem:[#allocation8 + $0x58] sm:$0xff]
    %v579 = vld [vmem:[#allocation8 + $0x60] sm:$0xff]
    %v580 = vld [vmem:[#allocation8 + $0x68] sm:$0xff]
    %v581 = vld [vmem:[#allocation8 + $0x70] sm:$0xff]
    %v582 = vld [vmem:[#allocation8 + $0x78] sm:$0xff]
    %v583 = vld [vmem:[#allocation8 + $0x80] sm:$0xff]
    %v584 = vld [vmem:[#allocation8 + $0x88] sm:$0xff]
    %v585 = vld [vmem:[#allocation8 + $0x90] sm:$0xff]
    %v586 = vld [vmem:[#allocation8 + $0x98] sm:$0xff]
    %v587 = vld [vmem:[#allocation8 + $0xa0] sm:$0xff]
    %v588 = vld [vmem:[#allocation8 + $0xa8] sm:$0xff]
    %v589 = vld [vmem:[#allocation8 + $0xb0] sm:$0xff]
    %v590 = vld [vmem:[#allocation8 + $0xb8] sm:$0xff]
    %v591 = vld [vmem:[#allocation8 + $0xc0] sm:$0xff]
    %v592 = vld [vmem:[#allocation8 + $0xc8] sm:$0xff]
    %v593 = vld [vmem:[#allocation8 + $0xd0] sm:$0xff]
    %v594 = vld [vmem:[#allocation8 + $0xd8] sm:$0xff]
    %v595 = vld [vmem:[#allocation8 + $0xe0] sm:$0xff]
    %v596 = vld [vmem:[#allocation8 + $0xe8] sm:$0xff]
    %v597 = vld [vmem:[#allocation8 + $0xf0] sm:$0xff]
    %v598 = vld [vmem:[#allocation8 + $0xf8] sm:$0xff]
    %v599 = vld [vmem:[#allocation8 + $0x100] sm:$0xff]
    %v600 = vld [vmem:[#allocation8 + $0x108] sm:$0xff]
    %v601 = vld [vmem:[#allocation8 + $0x110] sm:$0xff]
    %v602 = vld [vmem:[#allocation8 + $0x118] sm:$0xff]
    %v603 = vld [vmem:[#allocation8 + $0x120] sm:$0xff]
    %v604 = vld [vmem:[#allocation8 + $0x128] sm:$0xff]
    %v605 = vld [vmem:[#allocation8 + $0x130] sm:$0xff]
    %v606 = vld [vmem:[#allocation8 + $0x138] sm:$0xff]
    %v607 = vld [vmem:[#allocation8 + $0x140] sm:$0xff]
    %v608 = vld [vmem:[#allocation8 + $0x148] sm:$0xff]
    %v609 = vld [vmem:[#allocation8 + $0x150] sm:$0xff]
    %v610 = vld [vmem:[#allocation8 + $0x158] sm:$0xff]
    %v611 = vld [vmem:[#allocation8 + $0x160] sm:$0xff]
    %v612 = vld [vmem:[#allocation8 + $0x168] sm:$0xff]
    %v613 = vld [vmem:[#allocation8 + $0x170] sm:$0xff]
    %v614 = vld [vmem:[#allocation8 + $0x178] sm:$0xff]
    %615 = vmatprep.subr.mxu0 %v568
    %616 = vmatpush1.msra.mxu0 %v567
    %617 = vmatprep.subr.mxu0 %v571
    %618 = vmatpush1.msra.mxu0 %v570
    %619 = vmatprep.subr.mxu0 %v574
    %620 = vmatpush1.msra.mxu0 %v573
    %621 = vmatprep.subr.mxu0 %v577
    %622 = vmatpush1.msra.mxu0 %v576
    %623 = vmatprep.subr.mxu0 %v580
    %624 = vmatpush1.msra.mxu0 %v579
    %625 = vmatprep.subr.mxu0 %v583
    %626 = vmatpush1.msra.mxu0 %v582
    %627 = vmatprep.subr.mxu0 %v586
    %628 = vmatpush1.msra.mxu0 %v585
    %629 = vmatprep.subr.mxu0 %v589
    %630 = vmatpush1.msra.mxu0 %v588
    %631 = vmatprep.subr.mxu0 %v592
    %632 = vmatpush1.msra.mxu0 %v591
    %633 = vmatprep.subr.mxu0 %v595
    %634 = vmatpush1.msra.mxu0 %v594
    %635 = vmatprep.subr.mxu0 %v598
    %636 = vmatpush1.msra.mxu0 %v597
    %637 = vmatprep.subr.mxu0 %v601
    %638 = vmatpush1.msra.mxu0 %v600
    %639 = vmatprep.subr.mxu0 %v604
    %640 = vmatpush1.msra.mxu0 %v603
    %641 = vmatprep.subr.mxu0 %v607
    %642 = vmatpush1.msra.mxu0 %v606
    %643 = vmatprep.subr.mxu0 %v610
    %644 = vmatpush1.msra.mxu0 %v609
    %645 = vmatprep.subr.mxu0 %v613
    %646 = vmatpush1.msra.mxu0 %v612
    %647 = vmatprep.subr.mxu0 0.0
    %648 = vmatpush1.msra.mxu0 0.0
    %649 = vmatprep.subr.mxu0 0.0
    %650 = vmatpush1.msra.mxu0 0.0
    %651 = vmatprep.subr.mxu0 0.0
    %652 = vmatpush1.msra.mxu0 0.0
    %653 = vmatprep.subr.mxu0 0.0
    %654 = vmatpush1.msra.mxu0 0.0
    %655 = vmatprep.subr.mxu0 0.0
    %656 = vmatpush1.msra.mxu0 0.0
    %657 = vmatprep.subr.mxu0 0.0
    %658 = vmatpush1.msra.mxu0 0.0
    %659 = vmatprep.subr.mxu0 0.0
    %660 = vmatpush1.msra.mxu0 0.0
    %661 = vmatprep.subr.mxu0 0.0
    %662 = vmatpush1.msra.mxu0 0.0
    %663 = vmatprep.subr.mxu0 0.0
    %664 = vmatpush1.msra.mxu0 0.0
    %665 = vmatprep.subr.mxu0 0.0
    %666 = vmatpush1.msra.mxu0 0.0
    %667 = vmatprep.subr.mxu0 0.0
    %668 = vmatpush1.msra.mxu0 0.0
    %669 = vmatprep.subr.mxu0 0.0
    %670 = vmatpush1.msra.mxu0 0.0
    %671 = vmatprep.subr.mxu0 0.0
    %672 = vmatpush1.msra.mxu0 0.0
    %673 = vmatprep.subr.mxu0 0.0
    %674 = vmatpush1.msra.mxu0 0.0
    %675 = vmatprep.subr.mxu0 0.0
    %676 = vmatpush1.msra.mxu0 0.0
    %677 = vmatprep.subr.mxu0 0.0
    %678 = vmatpush1.msra.mxu0 0.0
    %679 = vmatprep.mubr.f32.mxu0 0.0
    %680 = vmatmul.mubr.f32.gmra.mrb[0].mxu0 %v562
    %v681 = vpop.f32.mrb[0].mxu0
    %v682 = vadd.f32 %v337, %v681
    %v683 = vpop.f32.mrb[0].mxu0
    %v684 = vadd.f32 %v341, %v683
    %685 = vdwg.mxu0
    %686 = vmatprep.subr.mxu0 0.0
    %687 = vmatpush1.msra.mxu0 %v569
    %688 = vmatprep.subr.mxu0 0.0
    %689 = vmatpush1.msra.mxu0 %v572
    %690 = vmatprep.subr.mxu0 0.0
    %691 = vmatpush1.msra.mxu0 %v575
    %692 = vmatprep.subr.mxu0 0.0
    %693 = vmatpush1.msra.mxu0 %v578
    %694 = vmatprep.subr.mxu0 0.0
    %695 = vmatpush1.msra.mxu0 %v581
    %696 = vmatprep.subr.mxu0 0.0
    %697 = vmatpush1.msra.mxu0 %v584
    %698 = vmatprep.subr.mxu0 0.0
    %699 = vmatpush1.msra.mxu0 %v587
    %700 = vmatprep.subr.mxu0 0.0
    %701 = vmatpush1.msra.mxu0 %v590
    %702 = vmatprep.subr.mxu0 0.0
    %703 = vmatpush1.msra.mxu0 %v593
    %704 = vmatprep.subr.mxu0 0.0
    %705 = vmatpush1.msra.mxu0 %v596
    %706 = vmatprep.subr.mxu0 0.0
    %707 = vmatpush1.msra.mxu0 %v599
    %708 = vmatprep.subr.mxu0 0.0
    %709 = vmatpush1.msra.mxu0 %v602
    %710 = vmatprep.subr.mxu0 0.0
    %711 = vmatpush1.msra.mxu0 %v605
    %712 = vmatprep.subr.mxu0 0.0
    %713 = vmatpush1.msra.mxu0 %v608
    %714 = vmatprep.subr.mxu0 0.0
    %715 = vmatpush1.msra.mxu0 %v611
    %716 = vmatprep.subr.mxu0 0.0
    %717 = vmatpush1.msra.mxu0 %v614
    %718 = vmatprep.subr.mxu0 0.0
    %719 = vmatpush1.msra.mxu0 0.0
    %720 = vmatprep.subr.mxu0 0.0
    %721 = vmatpush1.msra.mxu0 0.0
    %722 = vmatprep.subr.mxu0 0.0
    %723 = vmatpush1.msra.mxu0 0.0
    %724 = vmatprep.subr.mxu0 0.0
    %725 = vmatpush1.msra.mxu0 0.0
    %726 = vmatprep.subr.mxu0 0.0
    %727 = vmatpush1.msra.mxu0 0.0
    %728 = vmatprep.subr.mxu0 0.0
    %729 = vmatpush1.msra.mxu0 0.0
    %730 = vmatprep.subr.mxu0 0.0
    %731 = vmatpush1.msra.mxu0 0.0
    %732 = vmatprep.subr.mxu0 0.0
    %733 = vmatpush1.msra.mxu0 0.0
    %734 = vmatprep.subr.mxu0 0.0
    %735 = vmatpush1.msra.mxu0 0.0
    %736 = vmatprep.subr.mxu0 0.0
    %737 = vmatpush1.msra.mxu0 0.0
    %738 = vmatprep.subr.mxu0 0.0
    %739 = vmatpush1.msra.mxu0 0.0
    %740 = vmatprep.subr.mxu0 0.0
    %741 = vmatpush1.msra.mxu0 0.0
    %742 = vmatprep.subr.mxu0 0.0
    %743 = vmatpush1.msra.mxu0 0.0
    %744 = vmatprep.subr.mxu0 0.0
    %745 = vmatpush1.msra.mxu0 0.0
    %746 = vmatprep.subr.mxu0 0.0
    %747 = vmatpush1.msra.mxu0 0.0
    %748 = vmatprep.subr.mxu0 0.0
    %749 = vmatpush1.msra.mxu0 0.0
    %750 = vmatprep.mubr.f32.mxu0 0.0
    %751 = vmatmul.mubr.f32.gmra.mrb[0].mxu0 %v562
    %v752 = vpop.f32.mrb[0].mxu0
    %v753 = vadd.f32 %v345, %v752
    %v754 = vpop.f32.mrb[0].mxu0
    %755 = vdwg.mxu0
    %v756 = vadd.f32 %v564, %v682
    %v757 = vxor.u32 %v756, 2147483648
    %v758 = vmul.f32 %v757, 1.442695
    %v759 = vpow.pop %v758
    %v760 = vadd.f32 %v759, 1.0
    %v761 = vrcp.pop %v760
    %v762 = vmul.f32 1.0, %v761
    %v763 = vadd.f32 %v565, %v684
    %v764 = vxor.u32 %v763, 2147483648
    %v765 = vmul.f32 %v764, 1.442695
    %v766 = vpow.pop %v765
    %v767 = vadd.f32 %v766, 1.0
    %v768 = vrcp.pop %v767
    %v769 = vmul.f32 1.0, %v768
    %v770 = vmul.f32 %v762, %v753
    %v771 = vadd.f32 %v566, %v770
    %v772 = vtanh.pop %v771
    %v773 = vsub.f32 1.0, %v769
    %v774 = vmul.f32 %v773, %v772
    %v775 = vmul.f32 %v769, %v562
    %v776 = vadd.f32 %v774, %v775
    %s777 = scalar_lea.vmem [#allocation9], 8
    %778 = vst [vmem:[%s777] sm:$0xff] %v776
    %v779 = vld [vmem:[#allocation2 + $0x30] sm:$0xff]
    %v780 = vld [vmem:[#allocation2 + $0x38] sm:$0xff]
    %v781 = vld [vmem:[#allocation2 + $0x40] sm:$0xff]
    %v782 = vld [vmem:[#allocation8] sm:$0xff]
    %v783 = vld [vmem:[#allocation8 + $0x8] sm:$0xff]
    %v784 = vld [vmem:[#allocation8 + $0x10] sm:$0xff]
    %v785 = vld [vmem:[#allocation8 + $0x18] sm:$0xff]
    %v786 = vld [vmem:[#allocation8 + $0x20] sm:$0xff]
    %v787 = vld [vmem:[#allocation8 + $0x28] sm:$0xff]
    %v788 = vld [vmem:[#allocation8 + $0x30] sm:$0xff]
    %v789 = vld [vmem:[#allocation8 + $0x38] sm:$0xff]
    %v790 = vld [vmem:[#allocation8 + $0x40] sm:$0xff]
    %v791 = vld [vmem:[#allocation8 + $0x48] sm:$0xff]
    %v792 = vld [vmem:[#allocation8 + $0x50] sm:$0xff]
    %v793 = vld [vmem:[#allocation8 + $0x58] sm:$0xff]
    %v794 = vld [vmem:[#allocation8 + $0x60] sm:$0xff]
    %v795 = vld [vmem:[#allocation8 + $0x68] sm:$0xff]
    %v796 = vld [vmem:[#allocation8 + $0x70] sm:$0xff]
    %v797 = vld [vmem:[#allocation8 + $0x78] sm:$0xff]
    %v798 = vld [vmem:[#allocation8 + $0x80] sm:$0xff]
    %v799 = vld [vmem:[#allocation8 + $0x88] sm:$0xff]
    %v800 = vld [vmem:[#allocation8 + $0x90] sm:$0xff]
    %v801 = vld [vmem:[#allocation8 + $0x98] sm:$0xff]
    %v802 = vld [vmem:[#allocation8 + $0xa0] sm:$0xff]
    %v803 = vld [vmem:[#allocation8 + $0xa8] sm:$0xff]
    %v804 = vld [vmem:[#allocation8 + $0xb0] sm:$0xff]
    %v805 = vld [vmem:[#allocation8 + $0xb8] sm:$0xff]
    %v806 = vld [vmem:[#allocation8 + $0xc0] sm:$0xff]
    %v807 = vld [vmem:[#allocation8 + $0xc8] sm:$0xff]
    %v808 = vld [vmem:[#allocation8 + $0xd0] sm:$0xff]
    %v809 = vld [vmem:[#allocation8 + $0xd8] sm:$0xff]
    %v810 = vld [vmem:[#allocation8 + $0xe0] sm:$0xff]
    %v811 = vld [vmem:[#allocation8 + $0xe8] sm:$0xff]
    %v812 = vld [vmem:[#allocation8 + $0xf0] sm:$0xff]
    %v813 = vld [vmem:[#allocation8 + $0xf8] sm:$0xff]
    %v814 = vld [vmem:[#allocation8 + $0x100] sm:$0xff]
    %v815 = vld [vmem:[#allocation8 + $0x108] sm:$0xff]
    %v816 = vld [vmem:[#allocation8 + $0x110] sm:$0xff]
    %v817 = vld [vmem:[#allocation8 + $0x118] sm:$0xff]
    %v818 = vld [vmem:[#allocation8 + $0x120] sm:$0xff]
    %v819 = vld [vmem:[#allocation8 + $0x128] sm:$0xff]
    %v820 = vld [vmem:[#allocation8 + $0x130] sm:$0xff]
    %v821 = vld [vmem:[#allocation8 + $0x138] sm:$0xff]
    %v822 = vld [vmem:[#allocation8 + $0x140] sm:$0xff]
    %v823 = vld [vmem:[#allocation8 + $0x148] sm:$0xff]
    %v824 = vld [vmem:[#allocation8 + $0x150] sm:$0xff]
    %v825 = vld [vmem:[#allocation8 + $0x158] sm:$0xff]
    %v826 = vld [vmem:[#allocation8 + $0x160] sm:$0xff]
    %v827 = vld [vmem:[#allocation8 + $0x168] sm:$0xff]
    %v828 = vld [vmem:[#allocation8 + $0x170] sm:$0xff]
    %v829 = vld [vmem:[#allocation8 + $0x178] sm:$0xff]
    %830 = vmatprep.subr.mxu0 %v783
    %831 = vmatpush1.msra.mxu0 %v782
    %832 = vmatprep.subr.mxu0 %v786
    %833 = vmatpush1.msra.mxu0 %v785
    %834 = vmatprep.subr.mxu0 %v789
    %835 = vmatpush1.msra.mxu0 %v788
    %836 = vmatprep.subr.mxu0 %v792
    %837 = vmatpush1.msra.mxu0 %v791
    %838 = vmatprep.subr.mxu0 %v795
    %839 = vmatpush1.msra.mxu0 %v794
    %840 = vmatprep.subr.mxu0 %v798
    %841 = vmatpush1.msra.mxu0 %v797
    %842 = vmatprep.subr.mxu0 %v801
    %843 = vmatpush1.msra.mxu0 %v800
    %844 = vmatprep.subr.mxu0 %v804
    %845 = vmatpush1.msra.mxu0 %v803
    %846 = vmatprep.subr.mxu0 %v807
    %847 = vmatpush1.msra.mxu0 %v806
    %848 = vmatprep.subr.mxu0 %v810
    %849 = vmatpush1.msra.mxu0 %v809
    %850 = vmatprep.subr.mxu0 %v813
    %851 = vmatpush1.msra.mxu0 %v812
    %852 = vmatprep.subr.mxu0 %v816
    %853 = vmatpush1.msra.mxu0 %v815
    %854 = vmatprep.subr.mxu0 %v819
    %855 = vmatpush1.msra.mxu0 %v818
    %856 = vmatprep.subr.mxu0 %v822
    %857 = vmatpush1.msra.mxu0 %v821
    %858 = vmatprep.subr.mxu0 %v825
    %859 = vmatpush1.msra.mxu0 %v824
    %860 = vmatprep.subr.mxu0 %v828
    %861 = vmatpush1.msra.mxu0 %v827
    %862 = vmatprep.subr.mxu0 0.0
    %863 = vmatpush1.msra.mxu0 0.0
    %864 = vmatprep.subr.mxu0 0.0
    %865 = vmatpush1.msra.mxu0 0.0
    %866 = vmatprep.subr.mxu0 0.0
    %867 = vmatpush1.msra.mxu0 0.0
    %868 = vmatprep.subr.mxu0 0.0
    %869 = vmatpush1.msra.mxu0 0.0
    %870 = vmatprep.subr.mxu0 0.0
    %871 = vmatpush1.msra.mxu0 0.0
    %872 = vmatprep.subr.mxu0 0.0
    %873 = vmatpush1.msra.mxu0 0.0
    %874 = vmatprep.subr.mxu0 0.0
    %875 = vmatpush1.msra.mxu0 0.0
    %876 = vmatprep.subr.mxu0 0.0
    %877 = vmatpush1.msra.mxu0 0.0
    %878 = vmatprep.subr.mxu0 0.0
    %879 = vmatpush1.msra.mxu0 0.0
    %880 = vmatprep.subr.mxu0 0.0
    %881 = vmatpush1.msra.mxu0 0.0
    %882 = vmatprep.subr.mxu0 0.0
    %883 = vmatpush1.msra.mxu0 0.0
    %884 = vmatprep.subr.mxu0 0.0
    %885 = vmatpush1.msra.mxu0 0.0
    %886 = vmatprep.subr.mxu0 0.0
    %887 = vmatpush1.msra.mxu0 0.0
    %888 = vmatprep.subr.mxu0 0.0
    %889 = vmatpush1.msra.mxu0 0.0
    %890 = vmatprep.subr.mxu0 0.0
    %891 = vmatpush1.msra.mxu0 0.0
    %892 = vmatprep.subr.mxu0 0.0
    %893 = vmatpush1.msra.mxu0 0.0
    %894 = vmatprep.mubr.f32.mxu0 0.0
    %895 = vmatmul.mubr.f32.gmra.mrb[0].mxu0 %v776
    %v896 = vpop.f32.mrb[0].mxu0
    %v897 = vadd.f32 %v337, %v896
    %v898 = vpop.f32.mrb[0].mxu0
    %v899 = vadd.f32 %v341, %v898
    %900 = vdwg.mxu0
    %901 = vmatprep.subr.mxu0 0.0
    %902 = vmatpush1.msra.mxu0 %v784
    %903 = vmatprep.subr.mxu0 0.0
    %904 = vmatpush1.msra.mxu0 %v787
    %905 = vmatprep.subr.mxu0 0.0
    %906 = vmatpush1.msra.mxu0 %v790
    %907 = vmatprep.subr.mxu0 0.0
    %908 = vmatpush1.msra.mxu0 %v793
    %909 = vmatprep.subr.mxu0 0.0
    %910 = vmatpush1.msra.mxu0 %v796
    %911 = vmatprep.subr.mxu0 0.0
    %912 = vmatpush1.msra.mxu0 %v799
    %913 = vmatprep.subr.mxu0 0.0
    %914 = vmatpush1.msra.mxu0 %v802
    %915 = vmatprep.subr.mxu0 0.0
    %916 = vmatpush1.msra.mxu0 %v805
    %917 = vmatprep.subr.mxu0 0.0
    %918 = vmatpush1.msra.mxu0 %v808
    %919 = vmatprep.subr.mxu0 0.0
    %920 = vmatpush1.msra.mxu0 %v811
    %921 = vmatprep.subr.mxu0 0.0
    %922 = vmatpush1.msra.mxu0 %v814
    %923 = vmatprep.subr.mxu0 0.0
    %924 = vmatpush1.msra.mxu0 %v817
    %925 = vmatprep.subr.mxu0 0.0
    %926 = vmatpush1.msra.mxu0 %v820
    %927 = vmatprep.subr.mxu0 0.0
    %928 = vmatpush1.msra.mxu0 %v823
    %929 = vmatprep.subr.mxu0 0.0
    %930 = vmatpush1.msra.mxu0 %v826
    %931 = vmatprep.subr.mxu0 0.0
    %932 = vmatpush1.msra.mxu0 %v829
    %933 = vmatprep.subr.mxu0 0.0
    %934 = vmatpush1.msra.mxu0 0.0
    %935 = vmatprep.subr.mxu0 0.0
    %936 = vmatpush1.msra.mxu0 0.0
    %937 = vmatprep.subr.mxu0 0.0
    %938 = vmatpush1.msra.mxu0 0.0
    %939 = vmatprep.subr.mxu0 0.0
    %940 = vmatpush1.msra.mxu0 0.0
    %941 = vmatprep.subr.mxu0 0.0
    %942 = vmatpush1.msra.mxu0 0.0
    %943 = vmatprep.subr.mxu0 0.0
    %944 = vmatpush1.msra.mxu0 0.0
    %945 = vmatprep.subr.mxu0 0.0
    %946 = vmatpush1.msra.mxu0 0.0
    %947 = vmatprep.subr.mxu0 0.0
    %948 = vmatpush1.msra.mxu0 0.0
    %949 = vmatprep.subr.mxu0 0.0
    %950 = vmatpush1.msra.mxu0 0.0
    %951 = vmatprep.subr.mxu0 0.0
    %952 = vmatpush1.msra.mxu0 0.0
    %953 = vmatprep.subr.mxu0 0.0
    %954 = vmatpush1.msra.mxu0 0.0
    %955 = vmatprep.subr.mxu0 0.0
    %956 = vmatpush1.msra.mxu0 0.0
    %957 = vmatprep.subr.mxu0 0.0
    %958 = vmatpush1.msra.mxu0 0.0
    %959 = vmatprep.subr.mxu0 0.0
    %960 = vmatpush1.msra.mxu0 0.0
    %961 = vmatprep.subr.mxu0 0.0
    %962 = vmatpush1.msra.mxu0 0.0
    %963 = vmatprep.subr.mxu0 0.0
    %964 = vmatpush1.msra.mxu0 0.0
    %965 = vmatprep.mubr.f32.mxu0 0.0
    %966 = vmatmul.mubr.f32.gmra.mrb[0].mxu0 %v776
    %v967 = vpop.f32.mrb[0].mxu0
    %v968 = vadd.f32 %v345, %v967
    %v969 = vpop.f32.mrb[0].mxu0
    %970 = vdwg.mxu0
    %v971 = vadd.f32 %v779, %v897
    %v972 = vxor.u32 %v971, 2147483648
    %v973 = vmul.f32 %v972, 1.442695
    %v974 = vpow.pop %v973
    %v975 = vadd.f32 %v974, 1.0
    %v976 = vrcp.pop %v975
    %v977 = vmul.f32 1.0, %v976
    %v978 = vadd.f32 %v780, %v899
    %v979 = vxor.u32 %v978, 2147483648
    %v980 = vmul.f32 %v979, 1.442695
    %v981 = vpow.pop %v980
    %v982 = vadd.f32 %v981, 1.0
    %v983 = vrcp.pop %v982
    %v984 = vmul.f32 1.0, %v983
    %v985 = vmul.f32 %v977, %v968
    %v986 = vadd.f32 %v781, %v985
    %v987 = vtanh.pop %v986
    %v988 = vsub.f32 1.0, %v984
    %v989 = vmul.f32 %v988, %v987
    %v990 = vmul.f32 %v984, %v776
    %v991 = vadd.f32 %v989, %v990
    %s992 = scalar_lea.vmem [#allocation9], 16
    %993 = vst [vmem:[%s992] sm:$0xff] %v991
    %v994 = vld [vmem:[#allocation2 + $0x48] sm:$0xff]
    %v995 = vld [vmem:[#allocation2 + $0x50] sm:$0xff]
    %v996 = vld [vmem:[#allocation2 + $0x58] sm:$0xff]
    %v997 = vld [vmem:[#allocation8] sm:$0xff]
    %v998 = vld [vmem:[#allocation8 + $0x8] sm:$0xff]
    %v999 = vld [vmem:[#allocation8 + $0x10] sm:$0xff]
    %v1000 = vld [vmem:[#allocation8 + $0x18] sm:$0xff]
    %v1001 = vld [vmem:[#allocation8 + $0x20] sm:$0xff]
    %v1002 = vld [vmem:[#allocation8 + $0x28] sm:$0xff]
    %v1003 = vld [vmem:[#allocation8 + $0x30] sm:$0xff]
    %v1004 = vld [vmem:[#allocation8 + $0x38] sm:$0xff]
    %v1005 = vld [vmem:[#allocation8 + $0x40] sm:$0xff]
    %v1006 = vld [vmem:[#allocation8 + $0x48] sm:$0xff]
    %v1007 = vld [vmem:[#allocation8 + $0x50] sm:$0xff]
    %v1008 = vld [vmem:[#allocation8 + $0x58] sm:$0xff]
    %v1009 = vld [vmem:[#allocation8 + $0x60] sm:$0xff]
    %v1010 = vld [vmem:[#allocation8 + $0x68] sm:$0xff]
    %v1011 = vld [vmem:[#allocation8 + $0x70] sm:$0xff]
    %v1012 = vld [vmem:[#allocation8 + $0x78] sm:$0xff]
    %v1013 = vld [vmem:[#allocation8 + $0x80] sm:$0xff]
    %v1014 = vld [vmem:[#allocation8 + $0x88] sm:$0xff]
    %v1015 = vld [vmem:[#allocation8 + $0x90] sm:$0xff]
    %v1016 = vld [vmem:[#allocation8 + $0x98] sm:$0xff]
    %v1017 = vld [vmem:[#allocation8 + $0xa0] sm:$0xff]
    %v1018 = vld [vmem:[#allocation8 + $0xa8] sm:$0xff]
    %v1019 = vld [vmem:[#allocation8 + $0xb0] sm:$0xff]
    %v1020 = vld [vmem:[#allocation8 + $0xb8] sm:$0xff]
    %v1021 = vld [vmem:[#allocation8 + $0xc0] sm:$0xff]
    %v1022 = vld [vmem:[#allocation8 + $0xc8] sm:$0xff]
    %v1023 = vld [vmem:[#allocation8 + $0xd0] sm:$0xff]
    %v1024 = vld [vmem:[#allocation8 + $0xd8] sm:$0xff]
    %v1025 = vld [vmem:[#allocation8 + $0xe0] sm:$0xff]
    %v1026 = vld [vmem:[#allocation8 + $0xe8] sm:$0xff]
    %v1027 = vld [vmem:[#allocation8 + $0xf0] sm:$0xff]
    %v1028 = vld [vmem:[#allocation8 + $0xf8] sm:$0xff]
    %v1029 = vld [vmem:[#allocation8 + $0x100] sm:$0xff]
    %v1030 = vld [vmem:[#allocation8 + $0x108] sm:$0xff]
    %v1031 = vld [vmem:[#allocation8 + $0x110] sm:$0xff]
    %v1032 = vld [vmem:[#allocation8 + $0x118] sm:$0xff]
    %v1033 = vld [vmem:[#allocation8 + $0x120] sm:$0xff]
    %v1034 = vld [vmem:[#allocation8 + $0x128] sm:$0xff]
    %v1035 = vld [vmem:[#allocation8 + $0x130] sm:$0xff]
    %v1036 = vld [vmem:[#allocation8 + $0x138] sm:$0xff]
    %v1037 = vld [vmem:[#allocation8 + $0x140] sm:$0xff]
    %v1038 = vld [vmem:[#allocation8 + $0x148] sm:$0xff]
    %v1039 = vld [vmem:[#allocation8 + $0x150] sm:$0xff]
    %v1040 = vld [vmem:[#allocation8 + $0x158] sm:$0xff]
    %v1041 = vld [vmem:[#allocation8 + $0x160] sm:$0xff]
    %v1042 = vld [vmem:[#allocation8 + $0x168] sm:$0xff]
    %v1043 = vld [vmem:[#allocation8 + $0x170] sm:$0xff]
    %v1044 = vld [vmem:[#allocation8 + $0x178] sm:$0xff]
    %1045 = vmatprep.subr.mxu0 %v998
    %1046 = vmatpush1.msra.mxu0 %v997
    %1047 = vmatprep.subr.mxu0 %v1001
    %1048 = vmatpush1.msra.mxu0 %v1000
    %1049 = vmatprep.subr.mxu0 %v1004
    %1050 = vmatpush1.msra.mxu0 %v1003
    %1051 = vmatprep.subr.mxu0 %v1007
    %1052 = vmatpush1.msra.mxu0 %v1006
    %1053 = vmatprep.subr.mxu0 %v1010
    %1054 = vmatpush1.msra.mxu0 %v1009
    %1055 = vmatprep.subr.mxu0 %v1013
    %1056 = vmatpush1.msra.mxu0 %v1012
    %1057 = vmatprep.subr.mxu0 %v1016
    %1058 = vmatpush1.msra.mxu0 %v1015
    %1059 = vmatprep.subr.mxu0 %v1019
    %1060 = vmatpush1.msra.mxu0 %v1018
    %1061 = vmatprep.subr.mxu0 %v1022
    %1062 = vmatpush1.msra.mxu0 %v1021
    %1063 = vmatprep.subr.mxu0 %v1025
    %1064 = vmatpush1.msra.mxu0 %v1024
    %1065 = vmatprep.subr.mxu0 %v1028
    %1066 = vmatpush1.msra.mxu0 %v1027
    %1067 = vmatprep.subr.mxu0 %v1031
    %1068 = vmatpush1.msra.mxu0 %v1030
    %1069 = vmatprep.subr.mxu0 %v1034
    %1070 = vmatpush1.msra.mxu0 %v1033
    %1071 = vmatprep.subr.mxu0 %v1037
    %1072 = vmatpush1.msra.mxu0 %v1036
    %1073 = vmatprep.subr.mxu0 %v1040
    %1074 = vmatpush1.msra.mxu0 %v1039
    %1075 = vmatprep.subr.mxu0 %v1043
    %1076 = vmatpush1.msra.mxu0 %v1042
    %1077 = vmatprep.subr.mxu0 0.0
    %1078 = vmatpush1.msra.mxu0 0.0
    %1079 = vmatprep.subr.mxu0 0.0
    %1080 = vmatpush1.msra.mxu0 0.0
    %1081 = vmatprep.subr.mxu0 0.0
    %1082 = vmatpush1.msra.mxu0 0.0
    %1083 = vmatprep.subr.mxu0 0.0
    %1084 = vmatpush1.msra.mxu0 0.0
    %1085 = vmatprep.subr.mxu0 0.0
    %1086 = vmatpush1.msra.mxu0 0.0
    %1087 = vmatprep.subr.mxu0 0.0
    %1088 = vmatpush1.msra.mxu0 0.0
    %1089 = vmatprep.subr.mxu0 0.0
    %1090 = vmatpush1.msra.mxu0 0.0
    %1091 = vmatprep.subr.mxu0 0.0
    %1092 = vmatpush1.msra.mxu0 0.0
    %1093 = vmatprep.subr.mxu0 0.0
    %1094 = vmatpush1.msra.mxu0 0.0
    %1095 = vmatprep.subr.mxu0 0.0
    %1096 = vmatpush1.msra.mxu0 0.0
    %1097 = vmatprep.subr.mxu0 0.0
    %1098 = vmatpush1.msra.mxu0 0.0
    %1099 = vmatprep.subr.mxu0 0.0
    %1100 = vmatpush1.msra.mxu0 0.0
    %1101 = vmatprep.subr.mxu0 0.0
    %1102 = vmatpush1.msra.mxu0 0.0
    %1103 = vmatprep.subr.mxu0 0.0
    %1104 = vmatpush1.msra.mxu0 0.0
    %1105 = vmatprep.subr.mxu0 0.0
    %1106 = vmatpush1.msra.mxu0 0.0
    %1107 = vmatprep.subr.mxu0 0.0
    %1108 = vmatpush1.msra.mxu0 0.0
    %1109 = vmatprep.mubr.f32.mxu0 0.0
    %1110 = vmatmul.mubr.f32.gmra.mrb[0].mxu0 %v991
    %v1111 = vpop.f32.mrb[0].mxu0
    %v1112 = vadd.f32 %v337, %v1111
    %v1113 = vpop.f32.mrb[0].mxu0
    %v1114 = vadd.f32 %v341, %v1113
    %1115 = vdwg.mxu0
    %1116 = vmatprep.subr.mxu0 0.0
    %1117 = vmatpush1.msra.mxu0 %v999
    %1118 = vmatprep.subr.mxu0 0.0
    %1119 = vmatpush1.msra.mxu0 %v1002
    %1120 = vmatprep.subr.mxu0 0.0
    %1121 = vmatpush1.msra.mxu0 %v1005
    %1122 = vmatprep.subr.mxu0 0.0
    %1123 = vmatpush1.msra.mxu0 %v1008
    %1124 = vmatprep.subr.mxu0 0.0
    %1125 = vmatpush1.msra.mxu0 %v1011
    %1126 = vmatprep.subr.mxu0 0.0
    %1127 = vmatpush1.msra.mxu0 %v1014
    %1128 = vmatprep.subr.mxu0 0.0
    %1129 = vmatpush1.msra.mxu0 %v1017
    %1130 = vmatprep.subr.mxu0 0.0
    %1131 = vmatpush1.msra.mxu0 %v1020
    %1132 = vmatprep.subr.mxu0 0.0
    %1133 = vmatpush1.msra.mxu0 %v1023
    %1134 = vmatprep.subr.mxu0 0.0
    %1135 = vmatpush1.msra.mxu0 %v1026
    %1136 = vmatprep.subr.mxu0 0.0
    %1137 = vmatpush1.msra.mxu0 %v1029
    %1138 = vmatprep.subr.mxu0 0.0
    %1139 = vmatpush1.msra.mxu0 %v1032
    %1140 = vmatprep.subr.mxu0 0.0
    %1141 = vmatpush1.msra.mxu0 %v1035
    %1142 = vmatprep.subr.mxu0 0.0
    %1143 = vmatpush1.msra.mxu0 %v1038
    %1144 = vmatprep.subr.mxu0 0.0
    %1145 = vmatpush1.msra.mxu0 %v1041
    %1146 = vmatprep.subr.mxu0 0.0
    %1147 = vmatpush1.msra.mxu0 %v1044
    %1148 = vmatprep.subr.mxu0 0.0
    %1149 = vmatpush1.msra.mxu0 0.0
    %1150 = vmatprep.subr.mxu0 0.0
    %1151 = vmatpush1.msra.mxu0 0.0
    %1152 = vmatprep.subr.mxu0 0.0
    %1153 = vmatpush1.msra.mxu0 0.0
    %1154 = vmatprep.subr.mxu0 0.0
    %1155 = vmatpush1.msra.mxu0 0.0
    %1156 = vmatprep.subr.mxu0 0.0
    %1157 = vmatpush1.msra.mxu0 0.0
    %1158 = vmatprep.subr.mxu0 0.0
    %1159 = vmatpush1.msra.mxu0 0.0
    %1160 = vmatprep.subr.mxu0 0.0
    %1161 = vmatpush1.msra.mxu0 0.0
    %1162 = vmatprep.subr.mxu0 0.0
    %1163 = vmatpush1.msra.mxu0 0.0
    %1164 = vmatprep.subr.mxu0 0.0
    %1165 = vmatpush1.msra.mxu0 0.0
    %1166 = vmatprep.subr.mxu0 0.0
    %1167 = vmatpush1.msra.mxu0 0.0
    %1168 = vmatprep.subr.mxu0 0.0
    %1169 = vmatpush1.msra.mxu0 0.0
    %1170 = vmatprep.subr.mxu0 0.0
    %1171 = vmatpush1.msra.mxu0 0.0
    %1172 = vmatprep.subr.mxu0 0.0
    %1173 = vmatpush1.msra.mxu0 0.0
    %1174 = vmatprep.subr.mxu0 0.0
    %1175 = vmatpush1.msra.mxu0 0.0
    %1176 = vmatprep.subr.mxu0 0.0
    %1177 = vmatpush1.msra.mxu0 0.0
    %1178 = vmatprep.subr.mxu0 0.0
    %1179 = vmatpush1.msra.mxu0 0.0
    %1180 = vmatprep.mubr.f32.mxu0 0.0
    %1181 = vmatmul.mubr.f32.gmra.mrb[0].mxu0 %v991
    %v1182 = vpop.f32.mrb[0].mxu0
    %v1183 = vadd.f32 %v345, %v1182
    %v1184 = vpop.f32.mrb[0].mxu0
    %1185 = vdwg.mxu0
    %v1186 = vadd.f32 %v994, %v1112
    %v1187 = vxor.u32 %v1186, 2147483648
    %v1188 = vmul.f32 %v1187, 1.442695
    %v1189 = vpow.pop %v1188
    %v1190 = vadd.f32 %v1189, 1.0
    %v1191 = vrcp.pop %v1190
    %v1192 = vmul.f32 1.0, %v1191
    %v1193 = vadd.f32 %v995, %v1114
    %v1194 = vxor.u32 %v1193, 2147483648
    %v1195 = vmul.f32 %v1194, 1.442695
    %v1196 = vpow.pop %v1195
    %v1197 = vadd.f32 %v1196, 1.0
    %v1198 = vrcp.pop %v1197
    %v1199 = vmul.f32 1.0, %v1198
    %v1200 = vmul.f32 %v1192, %v1183
    %v1201 = vadd.f32 %v996, %v1200
    %v1202 = vtanh.pop %v1201
    %v1203 = vsub.f32 1.0, %v1199
    %v1204 = vmul.f32 %v1203, %v1202
    %v1205 = vmul.f32 %v1199, %v991
    %v1206 = vadd.f32 %v1204, %v1205
    %s1207 = scalar_lea.vmem [#allocation9], 24
    %1208 = vst [vmem:[%s1207] sm:$0xff] %v1206
    %v1209 = vld [vmem:[#allocation2 + $0x60] sm:$0xff]
    %v1210 = vld [vmem:[#allocation2 + $0x68] sm:$0xff]
    %v1211 = vld [vmem:[#allocation2 + $0x70] sm:$0xff]
    %v1212 = vld [vmem:[#allocation8] sm:$0xff]
    %v1213 = vld [vmem:[#allocation8 + $0x8] sm:$0xff]
    %v1214 = vld [vmem:[#allocation8 + $0x10] sm:$0xff]
    %v1215 = vld [vmem:[#allocation8 + $0x18] sm:$0xff]
    %v1216 = vld [vmem:[#allocation8 + $0x20] sm:$0xff]
    %v1217 = vld [vmem:[#allocation8 + $0x28] sm:$0xff]
    %v1218 = vld [vmem:[#allocation8 + $0x30] sm:$0xff]
    %v1219 = vld [vmem:[#allocation8 + $0x38] sm:$0xff]
    %v1220 = vld [vmem:[#allocation8 + $0x40] sm:$0xff]
    %v1221 = vld [vmem:[#allocation8 + $0x48] sm:$0xff]
    %v1222 = vld [vmem:[#allocation8 + $0x50] sm:$0xff]
    %v1223 = vld [vmem:[#allocation8 + $0x58] sm:$0xff]
    %v1224 = vld [vmem:[#allocation8 + $0x60] sm:$0xff]
    %v1225 = vld [vmem:[#allocation8 + $0x68] sm:$0xff]
    %v1226 = vld [vmem:[#allocation8 + $0x70] sm:$0xff]
    %v1227 = vld [vmem:[#allocation8 + $0x78] sm:$0xff]
    %v1228 = vld [vmem:[#allocation8 + $0x80] sm:$0xff]
    %v1229 = vld [vmem:[#allocation8 + $0x88] sm:$0xff]
    %v1230 = vld [vmem:[#allocation8 + $0x90] sm:$0xff]
    %v1231 = vld [vmem:[#allocation8 + $0x98] sm:$0xff]
    %v1232 = vld [vmem:[#allocation8 + $0xa0] sm:$0xff]
    %v1233 = vld [vmem:[#allocation8 + $0xa8] sm:$0xff]
    %v1234 = vld [vmem:[#allocation8 + $0xb0] sm:$0xff]
    %v1235 = vld [vmem:[#allocation8 + $0xb8] sm:$0xff]
    %v1236 = vld [vmem:[#allocation8 + $0xc0] sm:$0xff]
    %v1237 = vld [vmem:[#allocation8 + $0xc8] sm:$0xff]
    %v1238 = vld [vmem:[#allocation8 + $0xd0] sm:$0xff]
    %v1239 = vld [vmem:[#allocation8 + $0xd8] sm:$0xff]
    %v1240 = vld [vmem:[#allocation8 + $0xe0] sm:$0xff]
    %v1241 = vld [vmem:[#allocation8 + $0xe8] sm:$0xff]
    %v1242 = vld [vmem:[#allocation8 + $0xf0] sm:$0xff]
    %v1243 = vld [vmem:[#allocation8 + $0xf8] sm:$0xff]
    %v1244 = vld [vmem:[#allocation8 + $0x100] sm:$0xff]
    %v1245 = vld [vmem:[#allocation8 + $0x108] sm:$0xff]
    %v1246 = vld [vmem:[#allocation8 + $0x110] sm:$0xff]
    %v1247 = vld [vmem:[#allocation8 + $0x118] sm:$0xff]
    %v1248 = vld [vmem:[#allocation8 + $0x120] sm:$0xff]
    %v1249 = vld [vmem:[#allocation8 + $0x128] sm:$0xff]
    %v1250 = vld [vmem:[#allocation8 + $0x130] sm:$0xff]
    %v1251 = vld [vmem:[#allocation8 + $0x138] sm:$0xff]
    %v1252 = vld [vmem:[#allocation8 + $0x140] sm:$0xff]
    %v1253 = vld [vmem:[#allocation8 + $0x148] sm:$0xff]
    %v1254 = vld [vmem:[#allocation8 + $0x150] sm:$0xff]
    %v1255 = vld [vmem:[#allocation8 + $0x158] sm:$0xff]
    %v1256 = vld [vmem:[#allocation8 + $0x160] sm:$0xff]
    %v1257 = vld [vmem:[#allocation8 + $0x168] sm:$0xff]
    %v1258 = vld [vmem:[#allocation8 + $0x170] sm:$0xff]
    %v1259 = vld [vmem:[#allocation8 + $0x178] sm:$0xff]
    %1260 = vmatprep.subr.mxu0 %v1213
    %1261 = vmatpush1.msra.mxu0 %v1212
    %1262 = vmatprep.subr.mxu0 %v1216
    %1263 = vmatpush1.msra.mxu0 %v1215
    %1264 = vmatprep.subr.mxu0 %v1219
    %1265 = vmatpush1.msra.mxu0 %v1218
    %1266 = vmatprep.subr.mxu0 %v1222
    %1267 = vmatpush1.msra.mxu0 %v1221
    %1268 = vmatprep.subr.mxu0 %v1225
    %1269 = vmatpush1.msra.mxu0 %v1224
    %1270 = vmatprep.subr.mxu0 %v1228
    %1271 = vmatpush1.msra.mxu0 %v1227
    %1272 = vmatprep.subr.mxu0 %v1231
    %1273 = vmatpush1.msra.mxu0 %v1230
    %1274 = vmatprep.subr.mxu0 %v1234
    %1275 = vmatpush1.msra.mxu0 %v1233
    %1276 = vmatprep.subr.mxu0 %v1237
    %1277 = vmatpush1.msra.mxu0 %v1236
    %1278 = vmatprep.subr.mxu0 %v1240
    %1279 = vmatpush1.msra.mxu0 %v1239
    %1280 = vmatprep.subr.mxu0 %v1243
    %1281 = vmatpush1.msra.mxu0 %v1242
    %1282 = vmatprep.subr.mxu0 %v1246
    %1283 = vmatpush1.msra.mxu0 %v1245
    %1284 = vmatprep.subr.mxu0 %v1249
    %1285 = vmatpush1.msra.mxu0 %v1248
    %1286 = vmatprep.subr.mxu0 %v1252
    %1287 = vmatpush1.msra.mxu0 %v1251
    %1288 = vmatprep.subr.mxu0 %v1255
    %1289 = vmatpush1.msra.mxu0 %v1254
    %1290 = vmatprep.subr.mxu0 %v1258
    %1291 = vmatpush1.msra.mxu0 %v1257
    %1292 = vmatprep.subr.mxu0 0.0
    %1293 = vmatpush1.msra.mxu0 0.0
    %1294 = vmatprep.subr.mxu0 0.0
    %1295 = vmatpush1.msra.mxu0 0.0
    %1296 = vmatprep.subr.mxu0 0.0
    %1297 = vmatpush1.msra.mxu0 0.0
    %1298 = vmatprep.subr.mxu0 0.0
    %1299 = vmatpush1.msra.mxu0 0.0
    %1300 = vmatprep.subr.mxu0 0.0
    %1301 = vmatpush1.msra.mxu0 0.0
    %1302 = vmatprep.subr.mxu0 0.0
    %1303 = vmatpush1.msra.mxu0 0.0
    %1304 = vmatprep.subr.mxu0 0.0
    %1305 = vmatpush1.msra.mxu0 0.0
    %1306 = vmatprep.subr.mxu0 0.0
    %1307 = vmatpush1.msra.mxu0 0.0
    %1308 = vmatprep.subr.mxu0 0.0
    %1309 = vmatpush1.msra.mxu0 0.0
    %1310 = vmatprep.subr.mxu0 0.0
    %1311 = vmatpush1.msra.mxu0 0.0
    %1312 = vmatprep.subr.mxu0 0.0
    %1313 = vmatpush1.msra.mxu0 0.0
    %1314 = vmatprep.subr.mxu0 0.0
    %1315 = vmatpush1.msra.mxu0 0.0
    %1316 = vmatprep.subr.mxu0 0.0
    %1317 = vmatpush1.msra.mxu0 0.0
    %1318 = vmatprep.subr.mxu0 0.0
    %1319 = vmatpush1.msra.mxu0 0.0
    %1320 = vmatprep.subr.mxu0 0.0
    %1321 = vmatpush1.msra.mxu0 0.0
    %1322 = vmatprep.subr.mxu0 0.0
    %1323 = vmatpush1.msra.mxu0 0.0
    %1324 = vmatprep.mubr.f32.mxu0 0.0
    %1325 = vmatmul.mubr.f32.gmra.mrb[0].mxu0 %v1206
    %v1326 = vpop.f32.mrb[0].mxu0
    %v1327 = vadd.f32 %v337, %v1326
    %v1328 = vpop.f32.mrb[0].mxu0
    %v1329 = vadd.f32 %v341, %v1328
    %1330 = vdwg.mxu0
    %1331 = vmatprep.subr.mxu0 0.0
    %1332 = vmatpush1.msra.mxu0 %v1214
    %1333 = vmatprep.subr.mxu0 0.0
    %1334 = vmatpush1.msra.mxu0 %v1217
    %1335 = vmatprep.subr.mxu0 0.0
    %1336 = vmatpush1.msra.mxu0 %v1220
    %1337 = vmatprep.subr.mxu0 0.0
    %1338 = vmatpush1.msra.mxu0 %v1223
    %1339 = vmatprep.subr.mxu0 0.0
    %1340 = vmatpush1.msra.mxu0 %v1226
    %1341 = vmatprep.subr.mxu0 0.0
    %1342 = vmatpush1.msra.mxu0 %v1229
    %1343 = vmatprep.subr.mxu0 0.0
    %1344 = vmatpush1.msra.mxu0 %v1232
    %1345 = vmatprep.subr.mxu0 0.0
    %1346 = vmatpush1.msra.mxu0 %v1235
    %1347 = vmatprep.subr.mxu0 0.0
    %1348 = vmatpush1.msra.mxu0 %v1238
    %1349 = vmatprep.subr.mxu0 0.0
    %1350 = vmatpush1.msra.mxu0 %v1241
    %1351 = vmatprep.subr.mxu0 0.0
    %1352 = vmatpush1.msra.mxu0 %v1244
    %1353 = vmatprep.subr.mxu0 0.0
    %1354 = vmatpush1.msra.mxu0 %v1247
    %1355 = vmatprep.subr.mxu0 0.0
    %1356 = vmatpush1.msra.mxu0 %v1250
    %1357 = vmatprep.subr.mxu0 0.0
    %1358 = vmatpush1.msra.mxu0 %v1253
    %1359 = vmatprep.subr.mxu0 0.0
    %1360 = vmatpush1.msra.mxu0 %v1256
    %1361 = vmatprep.subr.mxu0 0.0
    %1362 = vmatpush1.msra.mxu0 %v1259
    %1363 = vmatprep.subr.mxu0 0.0
    %1364 = vmatpush1.msra.mxu0 0.0
    %1365 = vmatprep.subr.mxu0 0.0
    %1366 = vmatpush1.msra.mxu0 0.0
    %1367 = vmatprep.subr.mxu0 0.0
    %1368 = vmatpush1.msra.mxu0 0.0
    %1369 = vmatprep.subr.mxu0 0.0
    %1370 = vmatpush1.msra.mxu0 0.0
    %1371 = vmatprep.subr.mxu0 0.0
    %1372 = vmatpush1.msra.mxu0 0.0
    %1373 = vmatprep.subr.mxu0 0.0
    %1374 = vmatpush1.msra.mxu0 0.0
    %1375 = vmatprep.subr.mxu0 0.0
    %1376 = vmatpush1.msra.mxu0 0.0
    %1377 = vmatprep.subr.mxu0 0.0
    %1378 = vmatpush1.msra.mxu0 0.0
    %1379 = vmatprep.subr.mxu0 0.0
    %1380 = vmatpush1.msra.mxu0 0.0
    %1381 = vmatprep.subr.mxu0 0.0
    %1382 = vmatpush1.msra.mxu0 0.0
    %1383 = vmatprep.subr.mxu0 0.0
    %1384 = vmatpush1.msra.mxu0 0.0
    %1385 = vmatprep.subr.mxu0 0.0
    %1386 = vmatpush1.msra.mxu0 0.0
    %1387 = vmatprep.subr.mxu0 0.0
    %1388 = vmatpush1.msra.mxu0 0.0
    %1389 = vmatprep.subr.mxu0 0.0
    %1390 = vmatpush1.msra.mxu0 0.0
    %1391 = vmatprep.subr.mxu0 0.0
    %1392 = vmatpush1.msra.mxu0 0.0
    %1393 = vmatprep.subr.mxu0 0.0
    %1394 = vmatpush1.msra.mxu0 0.0
    %1395 = vmatprep.mubr.f32.mxu0 0.0
    %1396 = vmatmul.mubr.f32.gmra.mrb[0].mxu0 %v1206
    %v1397 = vpop.f32.mrb[0].mxu0
    %v1398 = vadd.f32 %v345, %v1397
    %v1399 = vpop.f32.mrb[0].mxu0
    %1400 = vdwg.mxu0
    %v1401 = vadd.f32 %v1209, %v1327
    %v1402 = vxor.u32 %v1401, 2147483648
    %v1403 = vmul.f32 %v1402, 1.442695
    %v1404 = vpow.pop %v1403
    %v1405 = vadd.f32 %v1404, 1.0
    %v1406 = vrcp.pop %v1405
    %v1407 = vmul.f32 1.0, %v1406
    %v1408 = vadd.f32 %v1210, %v1329
    %v1409 = vxor.u32 %v1408, 2147483648
    %v1410 = vmul.f32 %v1409, 1.442695
    %v1411 = vpow.pop %v1410
    %v1412 = vadd.f32 %v1411, 1.0
    %v1413 = vrcp.pop %v1412
    %v1414 = vmul.f32 1.0, %v1413
    %v1415 = vmul.f32 %v1407, %v1398
    %v1416 = vadd.f32 %v1211, %v1415
    %v1417 = vtanh.pop %v1416
    %v1418 = vsub.f32 1.0, %v1414
    %v1419 = vmul.f32 %v1418, %v1417
    %v1420 = vmul.f32 %v1414, %v1206
    %v1421 = vadd.f32 %v1419, %v1420
    %s1422 = scalar_lea.vmem [#allocation9], 32
    %1423 = vst [vmem:[%s1422] sm:$0xff] %v1421
    // Predicated region
    $region34: #{tpu_custom_call.1} parent=1 // pred_check
      _
    $region35: #{tpu_custom_call.1} parent=1 // pred_check_branch
      %1425 = sbr.rel (0) target = $region37
    $region36: #{tpu_custom_call.1} parent=1 // pred_region
      %s1427 = ssub.s32 640, 640
      %1428 = vsyncadd [#allocation5], %s1427
      %s1429 = sshll.u32 [#allocation9], 4
      %s1430 = int_to_ptr.vmem [resolvable:$true] %s1429
      %1435 = dma.vmem_to_hbm [thread:$0]  %s1430, 640, %s5, [#allocation5], 128, 128, 8
    $region37: #{tpu_custom_call.1} parent=1 // pred_fallthru
      _
    // Predicated region
    $region38: #{tpu_custom_call.1} parent=1 // pred_check
      _
    $region39: #{tpu_custom_call.1} parent=1 // pred_check_branch
      %1437 = sbr.rel (0) target = $region41
    $region40: #{tpu_custom_call.1} parent=1 // pred_region
      %1438 = dma.done [#allocation5], 640
    $region41: #{tpu_custom_call.1} parent=1 // pred_fallthru
      _
    %1439 = vsyncpa [#allocation4], 1
    %1440 = vsyncpa [#allocation7], 1
    %1441 = vsyncpa [#allocation5], 1

</llo_original>
